<compile_context>
chip_gen: v5e
topology: v5e:2x2
jax: 0.10.0
libtpu: 0.0.40
codegen_flags: <defaults>
</compile_context>

<pallas_src>
import math

import numpy as np
import jax
import jax.numpy as jnp
from jax.experimental import pallas as pl
from jax.experimental.pallas import tpu as pltpu

# ----------------------------- configuration --------------------------------
B = 2
C_STICK = 3            # `in_channels` ctor arg (dec_stickmen channels)
C_RGB = 3              # `out_channels` ctor arg (rgb channels)
NUM_CHANNELS = 8
MAX_NUM_CHANNELS = 16
EMBED_CHANNELS = 16
DIS_NUM_BLOCKS = 2
IMAGE_SIZE = 16
NUM_LABELS = 4


# ----------------------------- in-kernel helpers ----------------------------
def _conv3x3_band(xrows, w_ref, b_ref, H):
    """3x3 conv (zero pad 1) in the row layout.

    xrows: (Bb, H+2, W*Cin) value, rows zero-padded, width folded into lanes.
    w_ref: (3, W*Cin, W*Cout) banded weights (width zero-padding folded in).
    b_ref: (1, W*Cout) bias tiled over width.
    Returns (Bb*H, W*Cout) in float32.
    """
    Bb = xrows.shape[0]
    K = xrows.shape[2]
    N = w_ref.shape[2]
    acc = jnp.zeros((Bb * H, N), jnp.float32)
    for dy in range(3):
        a = xrows[:, dy:dy + H, :].reshape(Bb * H, K)
        acc = acc + jnp.dot(a, w_ref[dy], preferred_element_type=jnp.float32)
    return acc + b_ref[...]


def make_fused_kernel(metas):
    """metas: tuple of dicts with static ints H, W, cin, cout and bools preact, down."""
    n_blocks = len(metas)

    def kernel(*refs):
        it = iter(refs)
        xpad_ref = next(it)                 # (1, Bh, H0+2, W0*Cin0)
        emb_ref = next(it)                  # (1, Bh, Cemb)
        blk_refs = []
        for m in metas:
            n = 8 if m['down'] else 6
            blk_refs.append(tuple(next(it) for _ in range(n)))
        lin_w_ref = next(it)                # (Cemb, 1)
        lin_b_ref = next(it)                # (1, 1)
        hr_ref = next(it)                   # (Bh, Bh*Ho_last)
        hs_ref = next(it)                   # (Wo_last*Cemb, Cemb)
        feat_refs = [next(it) for _ in range(n_blocks)]
        score_ref = next(it)
        hpad_refs = [next(it) for _ in range(n_blocks)]
        inpad_refs = [next(it) for _ in range(n_blocks - 1)]

        cur = xpad_ref[0]                   # (Bh, H+2, W*Cin)
        Bh = cur.shape[0]
        emb = emb_ref[0]                    # (Bh, Cemb)

        y = None
        for bi, m in enumerate(metas):
            H, W, Cin, Cout = m['H'], m['W'], m['cin'], m['cout']
            if m['down']:
                w1, b1, w2, b2, ws, bs, pr, pc = blk_refs[bi]
            else:
                w1, b1, w2, b2, ws, bs = blk_refs[bi]
                pr = pc = None

            # ----- main branch: (ReLU) -> conv3x3 -> ReLU -> conv3x3 ---------
            main_in = jnp.maximum(cur, 0.0) if m['preact'] else cur
            h1 = jnp.maximum(_conv3x3_band(main_in, w1, b1, H), 0.0)    # (Bh*H, W*Cout)

            hp = hpad_refs[bi]                                          # (Bh, H+2, W*Cout)
            hp[...] = jnp.zeros(hp.shape, jnp.float32)
            hp[:, 1:H + 1, :] = h1.reshape(Bh, H, W * Cout)
            h2 = _conv3x3_band(hp[...], w2, b2, H)                      # (Bh*H, W*Cout)

            # ----- skip branch: conv1x1 on the raw (un-activated) input ------
            xint = cur[:, 1:H + 1, :].reshape(Bh * H, W * Cin)
            skip = jnp.dot(xint, ws[...], preferred_element_type=jnp.float32) + bs[...]

            y = h2 + skip                                               # (Bh*H, W*Cout)

            # ----- AvgPool2d(2) on the sum (pool is linear: == pooling each) -
            if m['down']:
                y = jnp.dot(jnp.dot(pr[...], y, preferred_element_type=jnp.float32),
                            pc[...], preferred_element_type=jnp.float32)
                Ho, Wo = H // 2, W // 2
            else:
                Ho, Wo = H, W

            feat_refs[bi][0] = y                                        # (Bh*Ho, Wo*Cout)

            if bi + 1 < n_blocks:
                ip = inpad_refs[bi]                                     # (Bh, Ho+2, Wo*Cout)
                ip[...] = jnp.zeros(ip.shape, jnp.float32)
                ip[:, 1:Ho + 1, :] = y.reshape(Bh, Ho, Wo * Cout)
                cur = ip[...]

        # ----- head: ReLU -> spatial sum -> linear -> + (pooled * embed).sum -
        f = jnp.maximum(y, 0.0)                                         # (Bh*Ho, Wo*Cemb)
        pooled = jnp.dot(jnp.dot(hr_ref[...], f, preferred_element_type=jnp.float32),
                         hs_ref[...], preferred_element_type=jnp.float32)   # (Bh, Cemb)
        lin = jnp.dot(pooled, lin_w_ref[...],
                      preferred_element_type=jnp.float32) + lin_b_ref[...]   # (Bh, 1)
        score_ref[0] = jnp.sum(pooled * emb, axis=1, keepdims=True) + lin

    return kernel


# ----------------------------- pallas_call wrapper --------------------------
def _replicated_spec(shape):
    nd = len(shape)
    return pl.BlockSpec(shape, lambda i, _nd=nd: (0,) * _nd)


def fused_forward_call(weights, metas, xpad4, emb3):
    """xpad4: (2, B, H+2, W*Cin) fake|real halves; emb3: (2, B, Cemb)."""
    nsplit, Bh = xpad4.shape[0], xpad4.shape[1]
    n_blocks = len(metas)
    kernel = make_fused_kernel(metas)

    inputs = [xpad4, emb3]
    in_specs = [
        pl.BlockSpec((1, Bh) + tuple(xpad4.shape[2:]), lambda i: (i, 0, 0, 0)),
        pl.BlockSpec((1, Bh, emb3.shape[2]), lambda i: (i, 0, 0)),
    ]
    for bp, m in zip(weights['blocks'], metas):
        names = ['w1', 'b1', 'w2', 'b2', 'ws', 'bs'] + (['pr', 'pc'] if m['down'] else [])
        for name in names:
            a = bp[name]
            inputs.append(a)
            in_specs.append(_replicated_spec(a.shape))
    for name in ['lin_w', 'lin_b', 'head_r', 'head_s']:
        a = weights[name]
        inputs.append(a)
        in_specs.append(_replicated_spec(a.shape))

    out_shapes, out_specs = [], []
    for m in metas:
        Ho = m['H'] // 2 if m['down'] else m['H']
        Wo = m['W'] // 2 if m['down'] else m['W']
        out_shapes.append(jax.ShapeDtypeStruct((nsplit, Bh * Ho, Wo * m['cout']), jnp.float32))
        out_specs.append(pl.BlockSpec((1, Bh * Ho, Wo * m['cout']), lambda i: (i, 0, 0)))
    out_shapes.append(jax.ShapeDtypeStruct((nsplit, Bh, 1), jnp.float32))
    out_specs.append(pl.BlockSpec((1, Bh, 1), lambda i: (i, 0, 0)))

    scratch_shapes = []
    for m in metas:                       # padded intermediate of each block's first conv
        scratch_shapes.append(pltpu.VMEM((Bh, m['H'] + 2, m['W'] * m['cout']), jnp.float32))
    for m in metas[1:]:                   # padded input of every block after the first
        scratch_shapes.append(pltpu.VMEM((Bh, m['H'] + 2, m['W'] * m['cin']), jnp.float32))

    return pl.pallas_call(
        kernel,
        grid=(nsplit,),
        out_shape=tuple(out_shapes),
        in_specs=in_specs,
        out_specs=tuple(out_specs),
        scratch_shapes=scratch_shapes,
        compiler_params=pltpu.CompilerParams(dimension_semantics=("parallel",)),
    )(*inputs)


# ----------------------------- parameter preparation ------------------------
def _spectral_normalize(w, eps=1e-4, iters=30):
    m = w.reshape(w.shape[0], -1).astype(jnp.float32)
    v = jnp.ones((m.shape[1],), jnp.float32)
    v = v / (jnp.linalg.norm(v) + eps)
    u = jnp.ones((m.shape[0],), jnp.float32)
    for _ in range(iters):
        u = m @ v
        u = u / (jnp.linalg.norm(u) + eps)
        v = m.T @ u
        v = v / (jnp.linalg.norm(v) + eps)
    sigma = jnp.dot(u, m @ v)
    return w / sigma


def _conv_weight(key, cout, cin, k):
    kw, kb = jax.random.split(key)
    fan = cin * k * k
    w = jax.random.normal(kw, (cout, cin, k, k), jnp.float32) / np.sqrt(fan)
    b = jax.random.normal(kb, (cout,), jnp.float32) * 0.01
    w = _spectral_normalize(w)                       # PyTorch layout (Cout, Cin, kh, kw)
    return np.asarray(jax.device_get(w)), np.asarray(jax.device_get(b))


def _band3_np(w_torch, W):
    """(Cout,Cin,3,3) conv weight -> (3, W*Cin, W*Cout) banded matrices.
    Width zero-padding of 1 is folded in (out-of-range taps are simply omitted)."""
    cout, cin = w_torch.shape[0], w_torch.shape[1]
    out = np.zeros((3, W * cin, W * cout), np.float32)
    for dy in range(3):
        for dx in range(3):
            blk = w_torch[:, :, dy, dx].T            # (Cin, Cout)
            for x in range(W):
                xx = x + dx - 1
                if 0 <= xx < W:
                    out[dy, xx * cin:(xx + 1) * cin, x * cout:(x + 1) * cout] = blk
    return out


def _pool_mats_np(b, H, W, C):
    """AvgPool2d(2) factored as row-pair-sum (left matmul) and col-pair-avg (right matmul)."""
    Ho, Wo = H // 2, W // 2
    pr = np.zeros((b * Ho, b * H), np.float32)
    for bb in range(b):
        for i in range(Ho):
            pr[bb * Ho + i, bb * H + 2 * i] = 1.0
            pr[bb * Ho + i, bb * H + 2 * i + 1] = 1.0
    pc = np.zeros((W * C, Wo * C), np.float32)
    for j in range(Wo):
        for c in range(C):
            pc[(2 * j) * C + c, j * C + c] = 0.25
            pc[(2 * j + 1) * C + c, j * C + c] = 0.25
    return pr, pc


def _head_mats_np(b, Ho, Wo, C):
    """Spatial sum per batch element factored as two matmuls."""
    r = np.zeros((b, b * Ho), np.float32)
    for bb in range(b):
        r[bb, bb * Ho:(bb + 1) * Ho] = 1.0
    s = np.zeros((Wo * C, C), np.float32)
    for x in range(Wo):
        s[x * C:(x + 1) * C, :] = np.eye(C, dtype=np.float32)
    return r, s


def _block_weights(key, cin, cout, H, W, down, preact, batch):
    k1, k2, k3 = jax.random.split(key, 3)
    w1, b1 = _conv_weight(k1, cout, cin, 3)
    w2, b2 = _conv_weight(k2, cout, cout, 3)
    ws, bs = _conv_weight(k3, cout, cin, 1)
    d = dict(
        w1=jnp.asarray(_band3_np(w1, W)),
        b1=jnp.asarray(np.tile(b1, W).reshape(1, W * cout)),
        w2=jnp.asarray(_band3_np(w2, W)),
        b2=jnp.asarray(np.tile(b2, W).reshape(1, W * cout)),
        ws=jnp.asarray(np.kron(np.eye(W, dtype=np.float32), ws[:, :, 0, 0].T)),
        bs=jnp.asarray(np.tile(bs, W).reshape(1, W * cout)),
    )
    if down:
        pr, pc = _pool_mats_np(batch, H, W, cout)
        d['pr'] = jnp.asarray(pr)
        d['pc'] = jnp.asarray(pc)
    meta = dict(H=H, W=W, cin=cin, cout=cout, preact=preact, down=down)
    return d, meta


def init_params(key, batch):
    keys = jax.random.split(key, DIS_NUM_BLOCKS + 2)
    blocks, metas = [], []
    H = W = IMAGE_SIZE

    # first down_block + skip of the Discriminator itself (no pre-activation)
    in_ch = C_STICK + C_RGB
    bw, bm = _block_weights(keys[0], in_ch, NUM_CHANNELS, H, W, True, False, batch)
    blocks.append(bw); metas.append(bm)
    H //= 2; W //= 2
    in_ch = NUM_CHANNELS
    out_ch = NUM_CHANNELS

    num_down_blocks = min(int(math.log(IMAGE_SIZE, 2)) - 2, DIS_NUM_BLOCKS)
    ki = 1
    for i in range(1, num_down_blocks):
        out_ch = min(in_ch * 2, MAX_NUM_CHANNELS)
        if i == DIS_NUM_BLOCKS - 1:
            out_ch = EMBED_CHANNELS
        bw, bm = _block_weights(keys[ki], in_ch, out_ch, H, W, True, True, batch); ki += 1
        blocks.append(bw); metas.append(bm)
        H //= 2; W //= 2
        in_ch = out_ch
    for i in range(num_down_blocks, DIS_NUM_BLOCKS):
        if i == DIS_NUM_BLOCKS - 1:
            out_ch = EMBED_CHANNELS
        bw, bm = _block_weights(keys[ki], in_ch, out_ch, H, W, False, True, batch); ki += 1
        blocks.append(bw); metas.append(bm)

    klw, klb, kemb = jax.random.split(keys[-1], 3)
    wl = jax.random.normal(klw, (1, EMBED_CHANNELS), jnp.float32) / np.sqrt(EMBED_CHANNELS)
    wl = _spectral_normalize(wl)
    lin_w = jnp.transpose(wl, (1, 0))                          # (Cemb, 1)
    lin_b = (jax.random.normal(klb, (1,), jnp.float32) * 0.01).reshape(1, 1)

    emb = jax.random.uniform(kemb, (NUM_LABELS, EMBED_CHANNELS), jnp.float32, -0.1, 0.1)
    embed_w = _spectral_normalize(emb)

    hr, hs = _head_mats_np(batch, H, W, EMBED_CHANNELS)
    weights = dict(blocks=blocks, lin_w=lin_w, lin_b=lin_b,
                   head_r=jnp.asarray(hr), head_s=jnp.asarray(hs),
                   embed_w=embed_w)
    return weights, tuple(metas)


# ----------------------------- forward glue (jitted) ------------------------
def make_forward(metas):
    @jax.jit
    def fwd(weights, dec_stickmen, fake_rgbs, target_rgbs, label):
        b = dec_stickmen.shape[0]
        h, w = dec_stickmen.shape[2], dec_stickmen.shape[3]
        embed = jnp.take(weights['embed_w'], label, axis=0)                 # (B, Cemb)

        # torch.cat(dim=2).view(b, -1, h, w): per-source channel interleave
        fake_in = jnp.concatenate([dec_stickmen, fake_rgbs], axis=2).reshape(b, -1, h, w)
        real_in = jnp.concatenate([dec_stickmen, target_rgbs], axis=2).reshape(b, -1, h, w)
        x = jnp.concatenate([fake_in, real_in], axis=0)                     # (2B, Cin, H, W)
        x = jnp.transpose(x, (0, 2, 3, 1)).astype(jnp.float32)              # NHWC
        cin = x.shape[-1]
        xpad = jnp.pad(x, ((0, 0), (1, 1), (0, 0), (0, 0)))                 # pad rows only
        xpad4 = xpad.reshape(2, b, h + 2, w * cin)                          # fake|real halves
        emb3 = jnp.stack([embed, embed], axis=0)                            # (2, B, Cemb)

        outs = fused_forward_call(weights, metas, xpad4, emb3)
        feats_flat, score_half = outs[:-1], outs[-1]
        score = score_half.reshape(2 * b)

        feats = []
        for m, ff in zip(metas, feats_flat):
            Ho = m['H'] // 2 if m['down'] else m['H']
            Wo = m['W'] // 2 if m['down'] else m['W']
            fn = ff.reshape(2 * b, Ho, Wo, m['cout'])                       # NHWC
            feats.append(jnp.transpose(fn, (0, 3, 1, 2)))                   # NCHW
        fake_features = [f[:b] for f in feats]
        real_features = [f[b:] for f in feats]
        return score[:b], fake_features, score[b:], real_features, embed

    return fwd


def discriminator_forward(fwd_fn, weights, data_dict):
    fake_rgbs = data_dict['fake_rgbs']
    target_rgbs = data_dict['target_rgbs']
    dec_stickmen = data_dict['dec_stickmen']
    label = data_dict['label']
    if fake_rgbs.ndim > 4:
        fake_rgbs = fake_rgbs[:, 0]
    if target_rgbs.ndim > 4:
        target_rgbs = target_rgbs[:, 0]
    if dec_stickmen.ndim > 4:
        dec_stickmen = dec_stickmen[:, 0]

    fake_score, fake_features, real_score, real_features, embed = fwd_fn(
        weights, dec_stickmen, fake_rgbs, target_rgbs, label)

    out = dict(data_dict)
    out['fake_features'] = fake_features
    out['real_features'] = real_features
    out['real_embedding'] = embed
    out['fake_score_G'] = fake_score
    out['fake_score_D'] = fake_score   # .detach() only affects autodiff; forward value identical
    out['real_score'] = real_score
    return out


# ----------------------------- main ------------------------------------------
if __name__ == "__main__":
    key = jax.random.PRNGKey(0)
    k1, k2, k3, k4, kp = jax.random.split(key, 5)
    data = {
        'fake_rgbs':    jax.random.normal(k1, (B, C_RGB, IMAGE_SIZE, IMAGE_SIZE), jnp.float32),
        'target_rgbs':  jax.random.normal(k2, (B, C_RGB, IMAGE_SIZE, IMAGE_SIZE), jnp.float32),
        'dec_stickmen': jax.random.normal(k3, (B, C_STICK, IMAGE_SIZE, IMAGE_SIZE), jnp.float32),
        'label':        jax.random.randint(k4, (B,), 0, NUM_LABELS),
    }
    weights, metas = init_params(kp, B)
    fwd_fn = make_forward(metas)

    out = discriminator_forward(fwd_fn, weights, data)
    jax.block_until_ready(out['real_score'])
    jax.block_until_ready(out['fake_score_G'])
    jax.block_until_ready(out['fake_score_D'])
    for f in out['real_features'] + out['fake_features']:
        jax.block_until_ready(f)

    assert out['real_score'].shape == (B,)
    assert out['fake_score_G'].shape == (B,)
    assert out['real_features'][0].shape == (B, NUM_CHANNELS, IMAGE_SIZE // 2, IMAGE_SIZE // 2)
    assert out['real_features'][-1].shape == (B, EMBED_CHANNELS, IMAGE_SIZE // 4, IMAGE_SIZE // 4)
    print("KERNEL_OK")
</pallas_src>

<mosaic_0001>
module attributes {stable_mosaic.version = 11 : i64} {
  func.func @kernel(%arg0: i32, %arg1: memref<1x2x18x96xf32, #tpu.memory_space<vmem>>, %arg2: memref<1x2x16xf32, #tpu.memory_space<vmem>>, %arg3: memref<3x96x128xf32, #tpu.memory_space<vmem>>, %arg4: memref<1x128xf32, #tpu.memory_space<vmem>>, %arg5: memref<3x128x128xf32, #tpu.memory_space<vmem>>, %arg6: memref<1x128xf32, #tpu.memory_space<vmem>>, %arg7: memref<96x128xf32, #tpu.memory_space<vmem>>, %arg8: memref<1x128xf32, #tpu.memory_space<vmem>>, %arg9: memref<16x32xf32, #tpu.memory_space<vmem>>, %arg10: memref<128x64xf32, #tpu.memory_space<vmem>>, %arg11: memref<3x64x128xf32, #tpu.memory_space<vmem>>, %arg12: memref<1x128xf32, #tpu.memory_space<vmem>>, %arg13: memref<3x128x128xf32, #tpu.memory_space<vmem>>, %arg14: memref<1x128xf32, #tpu.memory_space<vmem>>, %arg15: memref<64x128xf32, #tpu.memory_space<vmem>>, %arg16: memref<1x128xf32, #tpu.memory_space<vmem>>, %arg17: memref<8x16xf32, #tpu.memory_space<vmem>>, %arg18: memref<128x64xf32, #tpu.memory_space<vmem>>, %arg19: memref<16x1xf32, #tpu.memory_space<vmem>>, %arg20: memref<1x1xf32, #tpu.memory_space<vmem>>, %arg21: memref<2x8xf32, #tpu.memory_space<vmem>>, %arg22: memref<64x16xf32, #tpu.memory_space<vmem>>, %arg23: memref<1x16x64xf32, #tpu.memory_space<vmem>>, %arg24: memref<1x8x64xf32, #tpu.memory_space<vmem>>, %arg25: memref<1x2x1xf32, #tpu.memory_space<vmem>>, %arg26: memref<2x18x128xf32, #tpu.memory_space<vmem>>, %arg27: memref<2x10x128xf32, #tpu.memory_space<vmem>>, %arg28: memref<2x10x64xf32, #tpu.memory_space<vmem>>) attributes {dimension_semantics = [#tpu.dimension_semantics<parallel>], iteration_bounds = array<i64: 2>, scalar_prefetch = 0 : i64, scratch_operands = 3 : i64, tpu.core_type = #tpu.core_type<tc>, window_params = [{transform_indices = @transform_0, window_bounds = array<i64: 1, 2, 18, 96>}, {transform_indices = @transform_1, window_bounds = array<i64: 1, 2, 16>}, {pipeline_mode = #tpu.pipeline_mode<synchronous>, transform_indices = @transform_2, window_bounds = array<i64: 3, 96, 128>}, {pipeline_mode = #tpu.pipeline_mode<synchronous>, transform_indices = @transform_3, window_bounds = array<i64: 1, 128>}, {pipeline_mode = #tpu.pipeline_mode<synchronous>, transform_indices = @transform_4, window_bounds = array<i64: 3, 128, 128>}, {pipeline_mode = #tpu.pipeline_mode<synchronous>, transform_indices = @transform_5, window_bounds = array<i64: 1, 128>}, {pipeline_mode = #tpu.pipeline_mode<synchronous>, transform_indices = @transform_6, window_bounds = array<i64: 96, 128>}, {pipeline_mode = #tpu.pipeline_mode<synchronous>, transform_indices = @transform_7, window_bounds = array<i64: 1, 128>}, {pipeline_mode = #tpu.pipeline_mode<synchronous>, transform_indices = @transform_8, window_bounds = array<i64: 16, 32>}, {pipeline_mode = #tpu.pipeline_mode<synchronous>, transform_indices = @transform_9, window_bounds = array<i64: 128, 64>}, {pipeline_mode = #tpu.pipeline_mode<synchronous>, transform_indices = @transform_10, window_bounds = array<i64: 3, 64, 128>}, {pipeline_mode = #tpu.pipeline_mode<synchronous>, transform_indices = @transform_11, window_bounds = array<i64: 1, 128>}, {pipeline_mode = #tpu.pipeline_mode<synchronous>, transform_indices = @transform_12, window_bounds = array<i64: 3, 128, 128>}, {pipeline_mode = #tpu.pipeline_mode<synchronous>, transform_indices = @transform_13, window_bounds = array<i64: 1, 128>}, {pipeline_mode = #tpu.pipeline_mode<synchronous>, transform_indices = @transform_14, window_bounds = array<i64: 64, 128>}, {pipeline_mode = #tpu.pipeline_mode<synchronous>, transform_indices = @transform_15, window_bounds = array<i64: 1, 128>}, {pipeline_mode = #tpu.pipeline_mode<synchronous>, transform_indices = @transform_16, window_bounds = array<i64: 8, 16>}, {pipeline_mode = #tpu.pipeline_mode<synchronous>, transform_indices = @transform_17, window_bounds = array<i64: 128, 64>}, {pipeline_mode = #tpu.pipeline_mode<synchronous>, transform_indices = @transform_18, window_bounds = array<i64: 16, 1>}, {pipeline_mode = #tpu.pipeline_mode<synchronous>, transform_indices = @transform_19, window_bounds = array<i64: 1, 1>}, {pipeline_mode = #tpu.pipeline_mode<synchronous>, transform_indices = @transform_20, window_bounds = array<i64: 2, 8>}, {pipeline_mode = #tpu.pipeline_mode<synchronous>, transform_indices = @transform_21, window_bounds = array<i64: 64, 16>}, {transform_indices = @transform_22, window_bounds = array<i64: 1, 16, 64>}, {transform_indices = @transform_23, window_bounds = array<i64: 1, 8, 64>}, {transform_indices = @transform_24, window_bounds = array<i64: 1, 2, 1>}]} {
    %c0 = arith.constant 0 : index
    %c0_0 = arith.constant 0 : index
    %c0_1 = arith.constant 0 : index
    %c0_2 = arith.constant 0 : index
    %0 = vector.load %arg1[%c0, %c0_0, %c0_1, %c0_2] : memref<1x2x18x96xf32, #tpu.memory_space<vmem>>, vector<1x2x18x96xf32>
    %1 = vector.shape_cast %0 : vector<1x2x18x96xf32> to vector<2x18x96xf32>
    %c0_3 = arith.constant 0 : index
    %c0_4 = arith.constant 0 : index
    %c0_5 = arith.constant 0 : index
    %2 = vector.load %arg2[%c0_3, %c0_4, %c0_5] : memref<1x2x16xf32, #tpu.memory_space<vmem>>, vector<1x2x16xf32>
    %3 = vector.shape_cast %2 : vector<1x2x16xf32> to vector<2x16xf32>
    %cst = arith.constant 0.000000e+00 : f32
    %4 = vector.broadcast %cst : f32 to vector<32x128xf32>
    %5 = vector.extract_strided_slice %1 {offsets = [0, 0, 0], sizes = [2, 16, 96], strides = [1, 1, 1]} : vector<2x18x96xf32> to vector<2x16x96xf32>
    %6 = vector.shape_cast %5 : vector<2x16x96xf32> to vector<32x96xf32>
    %c0_6 = arith.constant 0 : index
    %c0_7 = arith.constant 0 : index
    %c0_8 = arith.constant 0 : index
    %7 = vector.load %arg3[%c0_6, %c0_7, %c0_8] : memref<3x96x128xf32, #tpu.memory_space<vmem>>, vector<1x96x128xf32>
    %8 = vector.shape_cast %7 : vector<1x96x128xf32> to vector<96x128xf32>
    %cst_9 = arith.constant dense<0.000000e+00> : vector<32x128xf32>
    %9 = tpu.matmul %6, %8, %cst_9 {dimension_numbers = #tpu.dot_dimension_numbers<[1], [0], [0], [1], [0, 0, 1, 1], [], []>} : vector<32x96xf32>, vector<96x128xf32>, vector<32x128xf32> -> vector<32x128xf32>
    %10 = arith.addf %4, %9 : vector<32x128xf32>
    %11 = vector.extract_strided_slice %1 {offsets = [0, 1, 0], sizes = [2, 16, 96], strides = [1, 1, 1]} : vector<2x18x96xf32> to vector<2x16x96xf32>
    %12 = vector.shape_cast %11 : vector<2x16x96xf32> to vector<32x96xf32>
    %c1 = arith.constant 1 : index
    %c0_10 = arith.constant 0 : index
    %c0_11 = arith.constant 0 : index
    %13 = vector.load %arg3[%c1, %c0_10, %c0_11] : memref<3x96x128xf32, #tpu.memory_space<vmem>>, vector<1x96x128xf32>
    %14 = vector.shape_cast %13 : vector<1x96x128xf32> to vector<96x128xf32>
    %cst_12 = arith.constant dense<0.000000e+00> : vector<32x128xf32>
    %15 = tpu.matmul %12, %14, %cst_12 {dimension_numbers = #tpu.dot_dimension_numbers<[1], [0], [0], [1], [0, 0, 1, 1], [], []>} : vector<32x96xf32>, vector<96x128xf32>, vector<32x128xf32> -> vector<32x128xf32>
    %16 = arith.addf %10, %15 : vector<32x128xf32>
    %17 = vector.extract_strided_slice %1 {offsets = [0, 2, 0], sizes = [2, 16, 96], strides = [1, 1, 1]} : vector<2x18x96xf32> to vector<2x16x96xf32>
    %18 = vector.shape_cast %17 : vector<2x16x96xf32> to vector<32x96xf32>
    %c2 = arith.constant 2 : index
    %c0_13 = arith.constant 0 : index
    %c0_14 = arith.constant 0 : index
    %19 = vector.load %arg3[%c2, %c0_13, %c0_14] : memref<3x96x128xf32, #tpu.memory_space<vmem>>, vector<1x96x128xf32>
    %20 = vector.shape_cast %19 : vector<1x96x128xf32> to vector<96x128xf32>
    %cst_15 = arith.constant dense<0.000000e+00> : vector<32x128xf32>
    %21 = tpu.matmul %18, %20, %cst_15 {dimension_numbers = #tpu.dot_dimension_numbers<[1], [0], [0], [1], [0, 0, 1, 1], [], []>} : vector<32x96xf32>, vector<96x128xf32>, vector<32x128xf32> -> vector<32x128xf32>
    %22 = arith.addf %16, %21 : vector<32x128xf32>
    %c0_16 = arith.constant 0 : index
    %c0_17 = arith.constant 0 : index
    %23 = vector.load %arg4[%c0_16, %c0_17] : memref<1x128xf32, #tpu.memory_space<vmem>>, vector<1x128xf32>
    %24 = vector.broadcast %23 : vector<1x128xf32> to vector<32x128xf32>
    %25 = arith.addf %22, %24 : vector<32x128xf32>
    %cst_18 = arith.constant 0.000000e+00 : f32
    %26 = vector.broadcast %cst_18 : f32 to vector<32x128xf32>
    %27 = arith.maximumf %25, %26 : vector<32x128xf32>
    %cst_19 = arith.constant 0.000000e+00 : f32
    %28 = vector.broadcast %cst_19 : f32 to vector<2x18x128xf32>
    %c0_20 = arith.constant 0 : index
    %c0_21 = arith.constant 0 : index
    %c0_22 = arith.constant 0 : index
    %29 = vector.load %arg26[%c0_20, %c0_21, %c0_22] : memref<2x18x128xf32, #tpu.memory_space<vmem>>, vector<2x18x128xf32>
    tpu.vector_store %arg26[%c0_20, %c0_21, %c0_22], %28 {strides = array<i32>} : memref<2x18x128xf32, #tpu.memory_space<vmem>>, vector<2x18x128xf32>,
    %30 = vector.shape_cast %27 : vector<32x128xf32> to vector<2x16x128xf32>
    %c0_23 = arith.constant 0 : index
    %c1_24 = arith.constant 1 : index
    %c0_25 = arith.constant 0 : index
    %31 = vector.load %arg26[%c0_23, %c1_24, %c0_25] : memref<2x18x128xf32, #tpu.memory_space<vmem>>, vector<2x16x128xf32>
    tpu.vector_store %arg26[%c0_23, %c1_24, %c0_25], %30 {strides = array<i32>} : memref<2x18x128xf32, #tpu.memory_space<vmem>>, vector<2x16x128xf32>,
    %c0_26 = arith.constant 0 : index
    %c0_27 = arith.constant 0 : index
    %c0_28 = arith.constant 0 : index
    %32 = vector.load %arg26[%c0_26, %c0_27, %c0_28] : memref<2x18x128xf32, #tpu.memory_space<vmem>>, vector<2x18x128xf32>
    %cst_29 = arith.constant 0.000000e+00 : f32
    %33 = vector.broadcast %cst_29 : f32 to vector<32x128xf32>
    %34 = vector.extract_strided_slice %32 {offsets = [0, 0, 0], sizes = [2, 16, 128], strides = [1, 1, 1]} : vector<2x18x128xf32> to vector<2x16x128xf32>
    %35 = vector.shape_cast %34 : vector<2x16x128xf32> to vector<32x128xf32>
    %c0_30 = arith.constant 0 : index
    %c0_31 = arith.constant 0 : index
    %c0_32 = arith.constant 0 : index
    %36 = vector.load %arg5[%c0_30, %c0_31, %c0_32] : memref<3x128x128xf32, #tpu.memory_space<vmem>>, vector<1x128x128xf32>
    %37 = vector.shape_cast %36 : vector<1x128x128xf32> to vector<128x128xf32>
    %cst_33 = arith.constant dense<0.000000e+00> : vector<32x128xf32>
    %38 = tpu.matmul %35, %37, %cst_33 {dimension_numbers = #tpu.dot_dimension_numbers<[1], [0], [0], [1], [0, 0, 1, 1], [], []>} : vector<32x128xf32>, vector<128x128xf32>, vector<32x128xf32> -> vector<32x128xf32>
    %39 = arith.addf %33, %38 : vector<32x128xf32>
    %40 = vector.extract_strided_slice %32 {offsets = [0, 1, 0], sizes = [2, 16, 128], strides = [1, 1, 1]} : vector<2x18x128xf32> to vector<2x16x128xf32>
    %41 = vector.shape_cast %40 : vector<2x16x128xf32> to vector<32x128xf32>
    %c1_34 = arith.constant 1 : index
    %c0_35 = arith.constant 0 : index
    %c0_36 = arith.constant 0 : index
    %42 = vector.load %arg5[%c1_34, %c0_35, %c0_36] : memref<3x128x128xf32, #tpu.memory_space<vmem>>, vector<1x128x128xf32>
    %43 = vector.shape_cast %42 : vector<1x128x128xf32> to vector<128x128xf32>
    %cst_37 = arith.constant dense<0.000000e+00> : vector<32x128xf32>
    %44 = tpu.matmul %41, %43, %cst_37 {dimension_numbers = #tpu.dot_dimension_numbers<[1], [0], [0], [1], [0, 0, 1, 1], [], []>} : vector<32x128xf32>, vector<128x128xf32>, vector<32x128xf32> -> vector<32x128xf32>
    %45 = arith.addf %39, %44 : vector<32x128xf32>
    %46 = vector.extract_strided_slice %32 {offsets = [0, 2, 0], sizes = [2, 16, 128], strides = [1, 1, 1]} : vector<2x18x128xf32> to vector<2x16x128xf32>
    %47 = vector.shape_cast %46 : vector<2x16x128xf32> to vector<32x128xf32>
    %c2_38 = arith.constant 2 : index
    %c0_39 = arith.constant 0 : index
    %c0_40 = arith.constant 0 : index
    %48 = vector.load %arg5[%c2_38, %c0_39, %c0_40] : memref<3x128x128xf32, #tpu.memory_space<vmem>>, vector<1x128x128xf32>
    %49 = vector.shape_cast %48 : vector<1x128x128xf32> to vector<128x128xf32>
    %cst_41 = arith.constant dense<0.000000e+00> : vector<32x128xf32>
    %50 = tpu.matmul %47, %49, %cst_41 {dimension_numbers = #tpu.dot_dimension_numbers<[1], [0], [0], [1], [0, 0, 1, 1], [], []>} : vector<32x128xf32>, vector<128x128xf32>, vector<32x128xf32> -> vector<32x128xf32>
    %51 = arith.addf %45, %50 : vector<32x128xf32>
    %c0_42 = arith.constant 0 : index
    %c0_43 = arith.constant 0 : index
    %52 = vector.load %arg6[%c0_42, %c0_43] : memref<1x128xf32, #tpu.memory_space<vmem>>, vector<1x128xf32>
    %53 = vector.broadcast %52 : vector<1x128xf32> to vector<32x128xf32>
    %54 = arith.addf %51, %53 : vector<32x128xf32>
    %55 = vector.extract_strided_slice %1 {offsets = [0, 1, 0], sizes = [2, 16, 96], strides = [1, 1, 1]} : vector<2x18x96xf32> to vector<2x16x96xf32>
    %56 = vector.shape_cast %55 : vector<2x16x96xf32> to vector<32x96xf32>
    %c0_44 = arith.constant 0 : index
    %c0_45 = arith.constant 0 : index
    %57 = vector.load %arg7[%c0_44, %c0_45] : memref<96x128xf32, #tpu.memory_space<vmem>>, vector<96x128xf32>
    %cst_46 = arith.constant dense<0.000000e+00> : vector<32x128xf32>
    %58 = tpu.matmul %56, %57, %cst_46 {dimension_numbers = #tpu.dot_dimension_numbers<[1], [0], [0], [1], [0, 0, 1, 1], [], []>} : vector<32x96xf32>, vector<96x128xf32>, vector<32x128xf32> -> vector<32x128xf32>
    %c0_47 = arith.constant 0 : index
    %c0_48 = arith.constant 0 : index
    %59 = vector.load %arg8[%c0_47, %c0_48] : memref<1x128xf32, #tpu.memory_space<vmem>>, vector<1x128xf32>
    %60 = vector.broadcast %59 : vector<1x128xf32> to vector<32x128xf32>
    %61 = arith.addf %58, %60 : vector<32x128xf32>
    %62 = arith.addf %54, %61 : vector<32x128xf32>
    %c0_49 = arith.constant 0 : index
    %c0_50 = arith.constant 0 : index
    %63 = vector.load %arg9[%c0_49, %c0_50] : memref<16x32xf32, #tpu.memory_space<vmem>>, vector<16x32xf32>
    %cst_51 = arith.constant dense<0.000000e+00> : vector<16x128xf32>
    %64 = tpu.matmul %63, %62, %cst_51 {dimension_numbers = #tpu.dot_dimension_numbers<[1], [0], [0], [1], [0, 0, 1, 1], [], []>} : vector<16x32xf32>, vector<32x128xf32>, vector<16x128xf32> -> vector<16x128xf32>
    %c0_52 = arith.constant 0 : index
    %c0_53 = arith.constant 0 : index
    %65 = vector.load %arg10[%c0_52, %c0_53] : memref<128x64xf32, #tpu.memory_space<vmem>>, vector<128x64xf32>
    %cst_54 = arith.constant dense<0.000000e+00> : vector<16x64xf32>
    %66 = tpu.matmul %64, %65, %cst_54 {dimension_numbers = #tpu.dot_dimension_numbers<[1], [0], [0], [1], [0, 0, 1, 1], [], []>} : vector<16x128xf32>, vector<128x64xf32>, vector<16x64xf32> -> vector<16x64xf32>
    %c0_55 = arith.constant 0 : index
    %c0_56 = arith.constant 0 : index
    %c0_57 = arith.constant 0 : index
    %67 = vector.load %arg23[%c0_55, %c0_56, %c0_57] : memref<1x16x64xf32, #tpu.memory_space<vmem>>, vector<1x16x64xf32>
    %68 = vector.shape_cast %67 : vector<1x16x64xf32> to vector<16x64xf32>
    %69 = vector.shape_cast %66 : vector<16x64xf32> to vector<1x16x64xf32>
    tpu.vector_store %arg23[%c0_55, %c0_56, %c0_57], %69 {strides = array<i32>} : memref<1x16x64xf32, #tpu.memory_space<vmem>>, vector<1x16x64xf32>,
    %cst_58 = arith.constant 0.000000e+00 : f32
    %70 = vector.broadcast %cst_58 : f32 to vector<2x10x64xf32>
    %c0_59 = arith.constant 0 : index
    %c0_60 = arith.constant 0 : index
    %c0_61 = arith.constant 0 : index
    %71 = vector.load %arg28[%c0_59, %c0_60, %c0_61] : memref<2x10x64xf32, #tpu.memory_space<vmem>>, vector<2x10x64xf32>
    tpu.vector_store %arg28[%c0_59, %c0_60, %c0_61], %70 {strides = array<i32>} : memref<2x10x64xf32, #tpu.memory_space<vmem>>, vector<2x10x64xf32>,
    %72 = vector.shape_cast %66 : vector<16x64xf32> to vector<2x8x64xf32>
    %c0_62 = arith.constant 0 : index
    %c1_63 = arith.constant 1 : index
    %c0_64 = arith.constant 0 : index
    %73 = vector.load %arg28[%c0_62, %c1_63, %c0_64] : memref<2x10x64xf32, #tpu.memory_space<vmem>>, vector<2x8x64xf32>
    tpu.vector_store %arg28[%c0_62, %c1_63, %c0_64], %72 {strides = array<i32>} : memref<2x10x64xf32, #tpu.memory_space<vmem>>, vector<2x8x64xf32>,
    %c0_65 = arith.constant 0 : index
    %c0_66 = arith.constant 0 : index
    %c0_67 = arith.constant 0 : index
    %74 = vector.load %arg28[%c0_65, %c0_66, %c0_67] : memref<2x10x64xf32, #tpu.memory_space<vmem>>, vector<2x10x64xf32>
    %cst_68 = arith.constant 0.000000e+00 : f32
    %75 = vector.broadcast %cst_68 : f32 to vector<2x10x64xf32>
    %76 = arith.maximumf %74, %75 : vector<2x10x64xf32>
    %cst_69 = arith.constant 0.000000e+00 : f32
    %77 = vector.broadcast %cst_69 : f32 to vector<16x128xf32>
    %78 = vector.extract_strided_slice %76 {offsets = [0, 0, 0], sizes = [2, 8, 64], strides = [1, 1, 1]} : vector<2x10x64xf32> to vector<2x8x64xf32>
    %79 = vector.shape_cast %78 : vector<2x8x64xf32> to vector<16x64xf32>
    %c0_70 = arith.constant 0 : index
    %c0_71 = arith.constant 0 : index
    %c0_72 = arith.constant 0 : index
    %80 = vector.load %arg11[%c0_70, %c0_71, %c0_72] : memref<3x64x128xf32, #tpu.memory_space<vmem>>, vector<1x64x128xf32>
    %81 = vector.shape_cast %80 : vector<1x64x128xf32> to vector<64x128xf32>
    %cst_73 = arith.constant dense<0.000000e+00> : vector<16x128xf32>
    %82 = tpu.matmul %79, %81, %cst_73 {dimension_numbers = #tpu.dot_dimension_numbers<[1], [0], [0], [1], [0, 0, 1, 1], [], []>} : vector<16x64xf32>, vector<64x128xf32>, vector<16x128xf32> -> vector<16x128xf32>
    %83 = arith.addf %77, %82 : vector<16x128xf32>
    %84 = vector.extract_strided_slice %76 {offsets = [0, 1, 0], sizes = [2, 8, 64], strides = [1, 1, 1]} : vector<2x10x64xf32> to vector<2x8x64xf32>
    %85 = vector.shape_cast %84 : vector<2x8x64xf32> to vector<16x64xf32>
    %c1_74 = arith.constant 1 : index
    %c0_75 = arith.constant 0 : index
    %c0_76 = arith.constant 0 : index
    %86 = vector.load %arg11[%c1_74, %c0_75, %c0_76] : memref<3x64x128xf32, #tpu.memory_space<vmem>>, vector<1x64x128xf32>
    %87 = vector.shape_cast %86 : vector<1x64x128xf32> to vector<64x128xf32>
    %cst_77 = arith.constant dense<0.000000e+00> : vector<16x128xf32>
    %88 = tpu.matmul %85, %87, %cst_77 {dimension_numbers = #tpu.dot_dimension_numbers<[1], [0], [0], [1], [0, 0, 1, 1], [], []>} : vector<16x64xf32>, vector<64x128xf32>, vector<16x128xf32> -> vector<16x128xf32>
    %89 = arith.addf %83, %88 : vector<16x128xf32>
    %90 = vector.extract_strided_slice %76 {offsets = [0, 2, 0], sizes = [2, 8, 64], strides = [1, 1, 1]} : vector<2x10x64xf32> to vector<2x8x64xf32>
    %91 = vector.shape_cast %90 : vector<2x8x64xf32> to vector<16x64xf32>
    %c2_78 = arith.constant 2 : index
    %c0_79 = arith.constant 0 : index
    %c0_80 = arith.constant 0 : index
    %92 = vector.load %arg11[%c2_78, %c0_79, %c0_80] : memref<3x64x128xf32, #tpu.memory_space<vmem>>, vector<1x64x128xf32>
    %93 = vector.shape_cast %92 : vector<1x64x128xf32> to vector<64x128xf32>
    %cst_81 = arith.constant dense<0.000000e+00> : vector<16x128xf32>
    %94 = tpu.matmul %91, %93, %cst_81 {dimension_numbers = #tpu.dot_dimension_numbers<[1], [0], [0], [1], [0, 0, 1, 1], [], []>} : vector<16x64xf32>, vector<64x128xf32>, vector<16x128xf32> -> vector<16x128xf32>
    %95 = arith.addf %89, %94 : vector<16x128xf32>
    %c0_82 = arith.constant 0 : index
    %c0_83 = arith.constant 0 : index
    %96 = vector.load %arg12[%c0_82, %c0_83] : memref<1x128xf32, #tpu.memory_space<vmem>>, vector<1x128xf32>
    %97 = vector.broadcast %96 : vector<1x128xf32> to vector<16x128xf32>
    %98 = arith.addf %95, %97 : vector<16x128xf32>
    %cst_84 = arith.constant 0.000000e+00 : f32
    %99 = vector.broadcast %cst_84 : f32 to vector<16x128xf32>
    %100 = arith.maximumf %98, %99 : vector<16x128xf32>
    %cst_85 = arith.constant 0.000000e+00 : f32
    %101 = vector.broadcast %cst_85 : f32 to vector<2x10x128xf32>
    %c0_86 = arith.constant 0 : index
    %c0_87 = arith.constant 0 : index
    %c0_88 = arith.constant 0 : index
    %102 = vector.load %arg27[%c0_86, %c0_87, %c0_88] : memref<2x10x128xf32, #tpu.memory_space<vmem>>, vector<2x10x128xf32>
    tpu.vector_store %arg27[%c0_86, %c0_87, %c0_88], %101 {strides = array<i32>} : memref<2x10x128xf32, #tpu.memory_space<vmem>>, vector<2x10x128xf32>,
    %103 = vector.shape_cast %100 : vector<16x128xf32> to vector<2x8x128xf32>
    %c0_89 = arith.constant 0 : index
    %c1_90 = arith.constant 1 : index
    %c0_91 = arith.constant 0 : index
    %104 = vector.load %arg27[%c0_89, %c1_90, %c0_91] : memref<2x10x128xf32, #tpu.memory_space<vmem>>, vector<2x8x128xf32>
    tpu.vector_store %arg27[%c0_89, %c1_90, %c0_91], %103 {strides = array<i32>} : memref<2x10x128xf32, #tpu.memory_space<vmem>>, vector<2x8x128xf32>,
    %c0_92 = arith.constant 0 : index
    %c0_93 = arith.constant 0 : index
    %c0_94 = arith.constant 0 : index
    %105 = vector.load %arg27[%c0_92, %c0_93, %c0_94] : memref<2x10x128xf32, #tpu.memory_space<vmem>>, vector<2x10x128xf32>
    %cst_95 = arith.constant 0.000000e+00 : f32
    %106 = vector.broadcast %cst_95 : f32 to vector<16x128xf32>
    %107 = vector.extract_strided_slice %105 {offsets = [0, 0, 0], sizes = [2, 8, 128], strides = [1, 1, 1]} : vector<2x10x128xf32> to vector<2x8x128xf32>
    %108 = vector.shape_cast %107 : vector<2x8x128xf32> to vector<16x128xf32>
    %c0_96 = arith.constant 0 : index
    %c0_97 = arith.constant 0 : index
    %c0_98 = arith.constant 0 : index
    %109 = vector.load %arg13[%c0_96, %c0_97, %c0_98] : memref<3x128x128xf32, #tpu.memory_space<vmem>>, vector<1x128x128xf32>
    %110 = vector.shape_cast %109 : vector<1x128x128xf32> to vector<128x128xf32>
    %cst_99 = arith.constant dense<0.000000e+00> : vector<16x128xf32>
    %111 = tpu.matmul %108, %110, %cst_99 {dimension_numbers = #tpu.dot_dimension_numbers<[1], [0], [0], [1], [0, 0, 1, 1], [], []>} : vector<16x128xf32>, vector<128x128xf32>, vector<16x128xf32> -> vector<16x128xf32>
    %112 = arith.addf %106, %111 : vector<16x128xf32>
    %113 = vector.extract_strided_slice %105 {offsets = [0, 1, 0], sizes = [2, 8, 128], strides = [1, 1, 1]} : vector<2x10x128xf32> to vector<2x8x128xf32>
    %114 = vector.shape_cast %113 : vector<2x8x128xf32> to vector<16x128xf32>
    %c1_100 = arith.constant 1 : index
    %c0_101 = arith.constant 0 : index
    %c0_102 = arith.constant 0 : index
    %115 = vector.load %arg13[%c1_100, %c0_101, %c0_102] : memref<3x128x128xf32, #tpu.memory_space<vmem>>, vector<1x128x128xf32>
    %116 = vector.shape_cast %115 : vector<1x128x128xf32> to vector<128x128xf32>
    %cst_103 = arith.constant dense<0.000000e+00> : vector<16x128xf32>
    %117 = tpu.matmul %114, %116, %cst_103 {dimension_numbers = #tpu.dot_dimension_numbers<[1], [0], [0], [1], [0, 0, 1, 1], [], []>} : vector<16x128xf32>, vector<128x128xf32>, vector<16x128xf32> -> vector<16x128xf32>
    %118 = arith.addf %112, %117 : vector<16x128xf32>
    %119 = vector.extract_strided_slice %105 {offsets = [0, 2, 0], sizes = [2, 8, 128], strides = [1, 1, 1]} : vector<2x10x128xf32> to vector<2x8x128xf32>
    %120 = vector.shape_cast %119 : vector<2x8x128xf32> to vector<16x128xf32>
    %c2_104 = arith.constant 2 : index
    %c0_105 = arith.constant 0 : index
    %c0_106 = arith.constant 0 : index
    %121 = vector.load %arg13[%c2_104, %c0_105, %c0_106] : memref<3x128x128xf32, #tpu.memory_space<vmem>>, vector<1x128x128xf32>
    %122 = vector.shape_cast %121 : vector<1x128x128xf32> to vector<128x128xf32>
    %cst_107 = arith.constant dense<0.000000e+00> : vector<16x128xf32>
    %123 = tpu.matmul %120, %122, %cst_107 {dimension_numbers = #tpu.dot_dimension_numbers<[1], [0], [0], [1], [0, 0, 1, 1], [], []>} : vector<16x128xf32>, vector<128x128xf32>, vector<16x128xf32> -> vector<16x128xf32>
    %124 = arith.addf %118, %123 : vector<16x128xf32>
    %c0_108 = arith.constant 0 : index
    %c0_109 = arith.constant 0 : index
    %125 = vector.load %arg14[%c0_108, %c0_109] : memref<1x128xf32, #tpu.memory_space<vmem>>, vector<1x128xf32>
    %126 = vector.broadcast %125 : vector<1x128xf32> to vector<16x128xf32>
    %127 = arith.addf %124, %126 : vector<16x128xf32>
    %128 = vector.extract_strided_slice %74 {offsets = [0, 1, 0], sizes = [2, 8, 64], strides = [1, 1, 1]} : vector<2x10x64xf32> to vector<2x8x64xf32>
    %129 = vector.shape_cast %128 : vector<2x8x64xf32> to vector<16x64xf32>
    %c0_110 = arith.constant 0 : index
    %c0_111 = arith.constant 0 : index
    %130 = vector.load %arg15[%c0_110, %c0_111] : memref<64x128xf32, #tpu.memory_space<vmem>>, vector<64x128xf32>
    %cst_112 = arith.constant dense<0.000000e+00> : vector<16x128xf32>
    %131 = tpu.matmul %129, %130, %cst_112 {dimension_numbers = #tpu.dot_dimension_numbers<[1], [0], [0], [1], [0, 0, 1, 1], [], []>} : vector<16x64xf32>, vector<64x128xf32>, vector<16x128xf32> -> vector<16x128xf32>
    %c0_113 = arith.constant 0 : index
    %c0_114 = arith.constant 0 : index
    %132 = vector.load %arg16[%c0_113, %c0_114] : memref<1x128xf32, #tpu.memory_space<vmem>>, vector<1x128xf32>
    %133 = vector.broadcast %132 : vector<1x128xf32> to vector<16x128xf32>
    %134 = arith.addf %131, %133 : vector<16x128xf32>
    %135 = arith.addf %127, %134 : vector<16x128xf32>
    %c0_115 = arith.constant 0 : index
    %c0_116 = arith.constant 0 : index
    %136 = vector.load %arg17[%c0_115, %c0_116] : memref<8x16xf32, #tpu.memory_space<vmem>>, vector<8x16xf32>
    %cst_117 = arith.constant dense<0.000000e+00> : vector<8x128xf32>
    %137 = tpu.matmul %136, %135, %cst_117 {dimension_numbers = #tpu.dot_dimension_numbers<[1], [0], [0], [1], [0, 0, 1, 1], [], []>} : vector<8x16xf32>, vector<16x128xf32>, vector<8x128xf32> -> vector<8x128xf32>
    %c0_118 = arith.constant 0 : index
    %c0_119 = arith.constant 0 : index
    %138 = vector.load %arg18[%c0_118, %c0_119] : memref<128x64xf32, #tpu.memory_space<vmem>>, vector<128x64xf32>
    %cst_120 = arith.constant dense<0.000000e+00> : vector<8x64xf32>
    %139 = tpu.matmul %137, %138, %cst_120 {dimension_numbers = #tpu.dot_dimension_numbers<[1], [0], [0], [1], [0, 0, 1, 1], [], []>} : vector<8x128xf32>, vector<128x64xf32>, vector<8x64xf32> -> vector<8x64xf32>
    %c0_121 = arith.constant 0 : index
    %c0_122 = arith.constant 0 : index
    %c0_123 = arith.constant 0 : index
    %140 = vector.load %arg24[%c0_121, %c0_122, %c0_123] : memref<1x8x64xf32, #tpu.memory_space<vmem>>, vector<1x8x64xf32>
    %141 = vector.shape_cast %140 : vector<1x8x64xf32> to vector<8x64xf32>
    %142 = vector.shape_cast %139 : vector<8x64xf32> to vector<1x8x64xf32>
    tpu.vector_store %arg24[%c0_121, %c0_122, %c0_123], %142 {strides = array<i32>} : memref<1x8x64xf32, #tpu.memory_space<vmem>>, vector<1x8x64xf32>,
    %cst_124 = arith.constant 0.000000e+00 : f32
    %143 = vector.broadcast %cst_124 : f32 to vector<8x64xf32>
    %144 = arith.maximumf %139, %143 : vector<8x64xf32>
    %c0_125 = arith.constant 0 : index
    %c0_126 = arith.constant 0 : index
    %145 = vector.load %arg21[%c0_125, %c0_126] : memref<2x8xf32, #tpu.memory_space<vmem>>, vector<2x8xf32>
    %cst_127 = arith.constant dense<0.000000e+00> : vector<2x64xf32>
    %146 = tpu.matmul %145, %144, %cst_127 {dimension_numbers = #tpu.dot_dimension_numbers<[1], [0], [0], [1], [0, 0, 1, 1], [], []>} : vector<2x8xf32>, vector<8x64xf32>, vector<2x64xf32> -> vector<2x64xf32>
    %c0_128 = arith.constant 0 : index
    %c0_129 = arith.constant 0 : index
    %147 = vector.load %arg22[%c0_128, %c0_129] : memref<64x16xf32, #tpu.memory_space<vmem>>, vector<64x16xf32>
    %cst_130 = arith.constant dense<0.000000e+00> : vector<2x16xf32>
    %148 = tpu.matmul %146, %147, %cst_130 {dimension_numbers = #tpu.dot_dimension_numbers<[1], [0], [0], [1], [0, 0, 1, 1], [], []>} : vector<2x64xf32>, vector<64x16xf32>, vector<2x16xf32> -> vector<2x16xf32>
    %c0_131 = arith.constant 0 : index
    %c0_132 = arith.constant 0 : index
    %149 = vector.load %arg19[%c0_131, %c0_132] : memref<16x1xf32, #tpu.memory_space<vmem>>, vector<16x1xf32>
    %cst_133 = arith.constant dense<0.000000e+00> : vector<2x1xf32>
    %150 = tpu.matmul %148, %149, %cst_133 {dimension_numbers = #tpu.dot_dimension_numbers<[1], [0], [0], [1], [0, 0, 1, 1], [], []>} : vector<2x16xf32>, vector<16x1xf32>, vector<2x1xf32> -> vector<2x1xf32>
    %c0_134 = arith.constant 0 : index
    %c0_135 = arith.constant 0 : index
    %151 = vector.load %arg20[%c0_134, %c0_135] : memref<1x1xf32, #tpu.memory_space<vmem>>, vector<1x1xf32>
    %152 = vector.broadcast %151 : vector<1x1xf32> to vector<2x1xf32>
    %153 = arith.addf %150, %152 : vector<2x1xf32>
    %154 = arith.mulf %148, %3 : vector<2x16xf32>
    %cst_136 = arith.constant dense<0.000000e+00> : vector<2xf32>
    %155 = vector.multi_reduction <add>, %154, %cst_136 [1] : vector<2x16xf32> to vector<2xf32>
    %156 = vector.shape_cast %155 : vector<2xf32> to vector<2x1xf32>
    %157 = arith.addf %156, %153 : vector<2x1xf32>
    %c0_137 = arith.constant 0 : index
    %c0_138 = arith.constant 0 : index
    %c0_139 = arith.constant 0 : index
    %158 = vector.load %arg25[%c0_137, %c0_138, %c0_139] : memref<1x2x1xf32, #tpu.memory_space<vmem>>, vector<1x2x1xf32>
    %159 = vector.shape_cast %158 : vector<1x2x1xf32> to vector<2x1xf32>
    %160 = vector.shape_cast %157 : vector<2x1xf32> to vector<1x2x1xf32>
    tpu.vector_store %arg25[%c0_137, %c0_138, %c0_139], %160 {strides = array<i32>} : memref<1x2x1xf32, #tpu.memory_space<vmem>>, vector<1x2x1xf32>,
    return
  }
  func.func @transform_0(%arg0: i32) -> (i32, i32, i32, i32) {
    %c0_i32 = arith.constant 0 : i32
    %c0_i32_0 = arith.constant 0 : i32
    %c0_i32_1 = arith.constant 0 : i32
    %c0_i32_2 = arith.constant 0 : i32
    return %arg0, %c0_i32, %c0_i32_0, %c0_i32_1 : i32, i32, i32, i32
  }
  func.func @transform_1(%arg0: i32) -> (i32, i32, i32) {
    %c0_i32 = arith.constant 0 : i32
    %c0_i32_0 = arith.constant 0 : i32
    %c0_i32_1 = arith.constant 0 : i32
    return %arg0, %c0_i32, %c0_i32_0 : i32, i32, i32
  }
  func.func @transform_2(%arg0: i32) -> (i32, i32, i32) {
    %c0_i32 = arith.constant 0 : i32
    %c0_i32_0 = arith.constant 0 : i32
    %c0_i32_1 = arith.constant 0 : i32
    %c0_i32_2 = arith.constant 0 : i32
    return %c0_i32, %c0_i32_0, %c0_i32_1 : i32, i32, i32
  }
  func.func @transform_3(%arg0: i32) -> (i32, i32) {
    %c0_i32 = arith.constant 0 : i32
    %c0_i32_0 = arith.constant 0 : i32
    %c0_i32_1 = arith.constant 0 : i32
    return %c0_i32, %c0_i32_0 : i32, i32
  }
  func.func @transform_4(%arg0: i32) -> (i32, i32, i32) {
    %c0_i32 = arith.constant 0 : i32
    %c0_i32_0 = arith.constant 0 : i32
    %c0_i32_1 = arith.constant 0 : i32
    %c0_i32_2 = arith.constant 0 : i32
    return %c0_i32, %c0_i32_0, %c0_i32_1 : i32, i32, i32
  }
  func.func @transform_5(%arg0: i32) -> (i32, i32) {
    %c0_i32 = arith.constant 0 : i32
    %c0_i32_0 = arith.constant 0 : i32
    %c0_i32_1 = arith.constant 0 : i32
    return %c0_i32, %c0_i32_0 : i32, i32
  }
  func.func @transform_6(%arg0: i32) -> (i32, i32) {
    %c0_i32 = arith.constant 0 : i32
    %c0_i32_0 = arith.constant 0 : i32
    %c0_i32_1 = arith.constant 0 : i32
    return %c0_i32, %c0_i32_0 : i32, i32
  }
  func.func @transform_7(%arg0: i32) -> (i32, i32) {
    %c0_i32 = arith.constant 0 : i32
    %c0_i32_0 = arith.constant 0 : i32
    %c0_i32_1 = arith.constant 0 : i32
    return %c0_i32, %c0_i32_0 : i32, i32
  }
  func.func @transform_8(%arg0: i32) -> (i32, i32) {
    %c0_i32 = arith.constant 0 : i32
    %c0_i32_0 = arith.constant 0 : i32
    %c0_i32_1 = arith.constant 0 : i32
    return %c0_i32, %c0_i32_0 : i32, i32
  }
  func.func @transform_9(%arg0: i32) -> (i32, i32) {
    %c0_i32 = arith.constant 0 : i32
    %c0_i32_0 = arith.constant 0 : i32
    %c0_i32_1 = arith.constant 0 : i32
    return %c0_i32, %c0_i32_0 : i32, i32
  }
  func.func @transform_10(%arg0: i32) -> (i32, i32, i32) {
    %c0_i32 = arith.constant 0 : i32
    %c0_i32_0 = arith.constant 0 : i32
    %c0_i32_1 = arith.constant 0 : i32
    %c0_i32_2 = arith.constant 0 : i32
    return %c0_i32, %c0_i32_0, %c0_i32_1 : i32, i32, i32
  }
  func.func @transform_11(%arg0: i32) -> (i32, i32) {
    %c0_i32 = arith.constant 0 : i32
    %c0_i32_0 = arith.constant 0 : i32
    %c0_i32_1 = arith.constant 0 : i32
    return %c0_i32, %c0_i32_0 : i32, i32
  }
  func.func @transform_12(%arg0: i32) -> (i32, i32, i32) {
    %c0_i32 = arith.constant 0 : i32
    %c0_i32_0 = arith.constant 0 : i32
    %c0_i32_1 = arith.constant 0 : i32
    %c0_i32_2 = arith.constant 0 : i32
    return %c0_i32, %c0_i32_0, %c0_i32_1 : i32, i32, i32
  }
  func.func @transform_13(%arg0: i32) -> (i32, i32) {
    %c0_i32 = arith.constant 0 : i32
    %c0_i32_0 = arith.constant 0 : i32
    %c0_i32_1 = arith.constant 0 : i32
    return %c0_i32, %c0_i32_0 : i32, i32
  }
  func.func @transform_14(%arg0: i32) -> (i32, i32) {
    %c0_i32 = arith.constant 0 : i32
    %c0_i32_0 = arith.constant 0 : i32
    %c0_i32_1 = arith.constant 0 : i32
    return %c0_i32, %c0_i32_0 : i32, i32
  }
  func.func @transform_15(%arg0: i32) -> (i32, i32) {
    %c0_i32 = arith.constant 0 : i32
    %c0_i32_0 = arith.constant 0 : i32
    %c0_i32_1 = arith.constant 0 : i32
    return %c0_i32, %c0_i32_0 : i32, i32
  }
  func.func @transform_16(%arg0: i32) -> (i32, i32) {
    %c0_i32 = arith.constant 0 : i32
    %c0_i32_0 = arith.constant 0 : i32
    %c0_i32_1 = arith.constant 0 : i32
    return %c0_i32, %c0_i32_0 : i32, i32
  }
  func.func @transform_17(%arg0: i32) -> (i32, i32) {
    %c0_i32 = arith.constant 0 : i32
    %c0_i32_0 = arith.constant 0 : i32
    %c0_i32_1 = arith.constant 0 : i32
    return %c0_i32, %c0_i32_0 : i32, i32
  }
  func.func @transform_18(%arg0: i32) -> (i32, i32) {
    %c0_i32 = arith.constant 0 : i32
    %c0_i32_0 = arith.constant 0 : i32
    %c0_i32_1 = arith.constant 0 : i32
    return %c0_i32, %c0_i32_0 : i32, i32
  }
  func.func @transform_19(%arg0: i32) -> (i32, i32) {
    %c0_i32 = arith.constant 0 : i32
    %c0_i32_0 = arith.constant 0 : i32
    %c0_i32_1 = arith.constant 0 : i32
    return %c0_i32, %c0_i32_0 : i32, i32
  }
  func.func @transform_20(%arg0: i32) -> (i32, i32) {
    %c0_i32 = arith.constant 0 : i32
    %c0_i32_0 = arith.constant 0 : i32
    %c0_i32_1 = arith.constant 0 : i32
    return %c0_i32, %c0_i32_0 : i32, i32
  }
  func.func @transform_21(%arg0: i32) -> (i32, i32) {
    %c0_i32 = arith.constant 0 : i32
    %c0_i32_0 = arith.constant 0 : i32
    %c0_i32_1 = arith.constant 0 : i32
    return %c0_i32, %c0_i32_0 : i32, i32
  }
  func.func @transform_22(%arg0: i32) -> (i32, i32, i32) {
    %c0_i32 = arith.constant 0 : i32
    %c0_i32_0 = arith.constant 0 : i32
    %c0_i32_1 = arith.constant 0 : i32
    return %arg0, %c0_i32, %c0_i32_0 : i32, i32, i32
  }
  func.func @transform_23(%arg0: i32) -> (i32, i32, i32) {
    %c0_i32 = arith.constant 0 : i32
    %c0_i32_0 = arith.constant 0 : i32
    %c0_i32_1 = arith.constant 0 : i32
    return %arg0, %c0_i32, %c0_i32_0 : i32, i32, i32
  }
  func.func @transform_24(%arg0: i32) -> (i32, i32, i32) {
    %c0_i32 = arith.constant 0 : i32
    %c0_i32_0 = arith.constant 0 : i32
    %c0_i32_1 = arith.constant 0 : i32
    return %arg0, %c0_i32, %c0_i32_0 : i32, i32, i32
  }
}

</mosaic_0001>

<llo_original>
// kernel: fwd.1
$region0: #{fwd.1}
  #allocation0 [shape = 'u32[]', space=smem, size = 0x4, offset = 0x4, fixed_abs, tag = 'smem constant byte address 0x4 - core index']
  #allocation1 [shape = 'u32[72,128]{1,0:T(1,128)}', space=vmem, size = 0x9000, scoped, tag = 'internal scratch']
  #allocation2 [shape = 'f32[2,18,128]{2,1,0:T(8,128)}', space=vmem, size = 0x6000, scoped, tag = 'scratch operand']
  #allocation3 [shape = 'f32[2,10,128]{2,1,0:T(8,128)}', space=vmem, size = 0x4000, scoped, tag = 'scratch operand']
  #allocation4 [shape = 'f32[2,10,64]{2,1,0:T(8,128)}', space=vmem, size = 0x4000, scoped, tag = 'scratch operand']
  #allocation5 [shape = 'f32[1,1]{1,0:T(1,128)S(1)}', space=vmem, size = 0x200, scoped, tag = 'scoped memory for fwd.1']
  %s0 = inlined_call_operand.vmem [shape: f32[2,2,18,96], index: 0, kind: input, shape index: {}]
  %s1 = inlined_call_operand.vmem [shape: f32[2,2,16], index: 1, kind: input, shape index: {}]
  %s2 = inlined_call_operand.vmem [shape: f32[3,96,128], index: 2, kind: input, shape index: {}]
  %s3 = inlined_call_operand.vmem [shape: f32[1,128], index: 3, kind: input, shape index: {}]
  %s4 = inlined_call_operand.vmem [shape: f32[3,128,128], index: 4, kind: input, shape index: {}]
  %s5 = inlined_call_operand.vmem [shape: f32[1,128], index: 5, kind: input, shape index: {}]
  %s6 = inlined_call_operand.vmem [shape: f32[96,128], index: 6, kind: input, shape index: {}]
  %s7 = inlined_call_operand.vmem [shape: f32[1,128], index: 7, kind: input, shape index: {}]
  %s8 = inlined_call_operand.vmem [shape: f32[16,32], index: 8, kind: input, shape index: {}]
  %s9 = inlined_call_operand.vmem [shape: f32[128,64], index: 9, kind: input, shape index: {}]
  %s10 = inlined_call_operand.vmem [shape: f32[3,64,128], index: 10, kind: input, shape index: {}]
  %s11 = inlined_call_operand.vmem [shape: f32[1,128], index: 11, kind: input, shape index: {}]
  %s12 = inlined_call_operand.vmem [shape: f32[3,128,128], index: 12, kind: input, shape index: {}]
  %s13 = inlined_call_operand.vmem [shape: f32[1,128], index: 13, kind: input, shape index: {}]
  %s14 = inlined_call_operand.vmem [shape: f32[64,128], index: 14, kind: input, shape index: {}]
  %s15 = inlined_call_operand.vmem [shape: f32[1,128], index: 15, kind: input, shape index: {}]
  %s16 = inlined_call_operand.vmem [shape: f32[8,16], index: 16, kind: input, shape index: {}]
  %s17 = inlined_call_operand.vmem [shape: f32[128,64], index: 17, kind: input, shape index: {}]
  %s18 = inlined_call_operand.vmem [shape: f32[16,1], index: 18, kind: input, shape index: {}]
  %s19 = inlined_call_operand.<no memory space> [shape: f32[1,1], index: 19, kind: input, shape index: {}]
  %s20 = inlined_call_operand.vmem [shape: f32[2,8], index: 20, kind: input, shape index: {}]
  %s21 = inlined_call_operand.vmem [shape: f32[64,16], index: 21, kind: input, shape index: {}]
  %s22 = inlined_call_operand.vmem [shape: f32[2,16,64], index: 22, kind: output, shape index: {0}]
  %s23 = inlined_call_operand.vmem [shape: f32[2,8,64], index: 23, kind: output, shape index: {1}]
  %s24 = inlined_call_operand.vmem [shape: f32[2,2,1], index: 24, kind: output, shape index: {2}]
  %25 = xla_tuple %s22, %s23, %s24
  %s26 = sld [smem:[#allocation0]]
  $region137: #{fwd.1} parent=0
    _
  %s28 = ssub.s32 1, %s26
  %s29 = scalar_select 0, %s28, %s26
  %v30 = vstv %s19
  %31 = vst [vmem:[#allocation5] sm:$0x1] %v30
  loop: start=0, step=1, limit=4
  $region2: #{fwd.1} parent=0 // loop_pre_header
    _
  $region3: #{fwd.1} parent=0 // loop_header
    %s33 = sphi 0, %s37
    %p34 = scmp.ge.s32.totalorder %s33, 4
    %s43 = sphi 0, %s45
    %s46 = sphi 0, %s43
    %s47 = sphi 0, %s46
    %s63 = sphi 0, %s47
    %s69 = sphi 0, %s71
    %s72 = sphi 0, %s69
    %s73 = sphi 0, %s72
    %s89 = sphi 0, %s73
    %s93 = sphi 0, %s93
    %s95 = sphi 0, %s93
    %s96 = sphi 0, %s95
    %s110 = sphi 0, %s96
    %s114 = sphi 0, %s114
    %s116 = sphi 0, %s114
    %s117 = sphi 0, %s116
    %s131 = sphi 0, %s117
    %s135 = sphi 0, %s135
    %s137 = sphi 0, %s135
    %s138 = sphi 0, %s137
    %s152 = sphi 0, %s138
    %s156 = sphi 0, %s156
    %s158 = sphi 0, %s156
    %s159 = sphi 0, %s158
    %s173 = sphi 0, %s159
    %s177 = sphi 0, %s177
    %s179 = sphi 0, %s177
    %s180 = sphi 0, %s179
    %s194 = sphi 0, %s180
    %s198 = sphi 0, %s198
    %s200 = sphi 0, %s198
    %s201 = sphi 0, %s200
    %s215 = sphi 0, %s201
    %s219 = sphi 0, %s219
    %s221 = sphi 0, %s219
    %s222 = sphi 0, %s221
    %s236 = sphi 0, %s222
    %s240 = sphi 0, %s240
    %s242 = sphi 0, %s240
    %s243 = sphi 0, %s242
    %s257 = sphi 0, %s243
    %s261 = sphi 0, %s261
    %s263 = sphi 0, %s261
    %s264 = sphi 0, %s263
    %s278 = sphi 0, %s264
    %s282 = sphi 0, %s282
    %s284 = sphi 0, %s282
    %s285 = sphi 0, %s284
    %s299 = sphi 0, %s285
    %s303 = sphi 0, %s303
    %s305 = sphi 0, %s303
    %s306 = sphi 0, %s305
    %s320 = sphi 0, %s306
    %s324 = sphi 0, %s324
    %s326 = sphi 0, %s324
    %s327 = sphi 0, %s326
    %s341 = sphi 0, %s327
    %s345 = sphi 0, %s345
    %s347 = sphi 0, %s345
    %s348 = sphi 0, %s347
    %s362 = sphi 0, %s348
    %s366 = sphi 0, %s366
    %s368 = sphi 0, %s366
    %s369 = sphi 0, %s368
    %s383 = sphi 0, %s369
    %s387 = sphi 0, %s387
    %s389 = sphi 0, %s387
    %s390 = sphi 0, %s389
    %s404 = sphi 0, %s390
    %s408 = sphi 0, %s408
    %s410 = sphi 0, %s408
    %s411 = sphi 0, %s410
    %s425 = sphi 0, %s411
    %s429 = sphi 0, %s429
    %s431 = sphi 0, %s429
    %s432 = sphi 0, %s431
    %s446 = sphi 0, %s432
    %s450 = sphi 0, %s450
    %s452 = sphi 0, %s450
    %s453 = sphi 0, %s452
    %s467 = sphi 0, %s453
    %s471 = sphi 0, %s471
    %s473 = sphi 0, %s471
    %s474 = sphi 0, %s473
    %s488 = sphi 0, %s474
    %s492 = sphi 0, %s492
    %s494 = sphi 0, %s492
    %s495 = sphi 0, %s494
    %s509 = sphi 0, %s495
    %s515 = sphi 0, %s517
    %s518 = sphi 0, %s515
    %s519 = sphi 0, %s518
    %s535 = sphi 0, %s519
    %s541 = sphi 0, %s543
    %s544 = sphi 0, %s541
    %s545 = sphi 0, %s544
    %s561 = sphi 0, %s545
    %s567 = sphi 0, %s569
    %s570 = sphi 0, %s567
    %s571 = sphi 0, %s570
    %s587 = sphi 0, %s571
  $region4: #{fwd.1} parent=0 // loop_header_branch
    %36 = sbr.rel (%p34) target = $region8
  $region5: #{fwd.1} parent=0 // loop_body
    %s38 = ssub.s32 %s33, 1
    %s39 = ssub.s32 %s33, 2
    %s40 = sadd.s32 %s33, 1
    %s41 = ssub.s32 %s33, %s40
    %p42 = scmp.eq.s32.totalorder %s41, 0
    %s44 = sadd.s32 %s43, 1
    %s45 = scalar_select %p42, %s43, %s44
    %p48 = pneg %p42
    %p49 = scmp.eq.s32.totalorder %s33, 1
    %p50 = por %p48, %p49
    %p51 = scmp.ne.s32.totalorder %s43, %s46
    %p52 = scmp.eq.s32.totalorder %s33, 0
    %p53 = por %p51, %p52
    %p54 = scmp.ne.s32.totalorder %s43, %s46
    %p55 = scmp.eq.s32.totalorder %s38, 1
    %p56 = por %p54, %p55
    %p57 = scmp.ne.s32.totalorder %s46, %s47
    %p58 = scmp.eq.s32.totalorder %s38, 0
    %p59 = por %p57, %p58
    %p60 = scmp.ne.s32.totalorder %s46, %s47
    %p61 = scmp.eq.s32.totalorder %s39, 1
    %p62 = por %p60, %p61
    %p64 = scmp.ne.s32.totalorder %s47, %s63
    %p65 = scmp.eq.s32.totalorder %s39, 0
    %p66 = por %p64, %p65
    %s67 = ssub.s32 %s33, %s40
    %p68 = scmp.eq.s32.totalorder %s67, 0
    %s70 = sadd.s32 %s69, 1
    %s71 = scalar_select %p68, %s69, %s70
    %p74 = pneg %p68
    %p75 = scmp.eq.s32.totalorder %s33, 1
    %p76 = por %p74, %p75
    %p77 = scmp.ne.s32.totalorder %s69, %s72
    %p78 = scmp.eq.s32.totalorder %s33, 0
    %p79 = por %p77, %p78
    %p80 = scmp.ne.s32.totalorder %s69, %s72
    %p81 = scmp.eq.s32.totalorder %s38, 1
    %p82 = por %p80, %p81
    %p83 = scmp.ne.s32.totalorder %s72, %s73
    %p84 = scmp.eq.s32.totalorder %s38, 0
    %p85 = por %p83, %p84
    %p86 = scmp.ne.s32.totalorder %s72, %s73
    %p87 = scmp.eq.s32.totalorder %s39, 1
    %p88 = por %p86, %p87
    %p90 = scmp.ne.s32.totalorder %s73, %s89
    %p91 = scmp.eq.s32.totalorder %s39, 0
    %p92 = por %p90, %p91
    %s94 = sadd.s32 %s93, 1
    %p97 = scmp.eq.s32.totalorder %s33, 1
    %p98 = scmp.ne.s32.totalorder %s93, %s95
    %p99 = scmp.eq.s32.totalorder %s33, 0
    %p100 = por %p98, %p99
    %p101 = scmp.ne.s32.totalorder %s93, %s95
    %p102 = scmp.eq.s32.totalorder %s38, 1
    %p103 = por %p101, %p102
    %p104 = scmp.ne.s32.totalorder %s95, %s96
    %p105 = scmp.eq.s32.totalorder %s38, 0
    %p106 = por %p104, %p105
    %p107 = scmp.ne.s32.totalorder %s95, %s96
    %p108 = scmp.eq.s32.totalorder %s39, 1
    %p109 = por %p107, %p108
    %p111 = scmp.ne.s32.totalorder %s96, %s110
    %p112 = scmp.eq.s32.totalorder %s39, 0
    %p113 = por %p111, %p112
    %s115 = sadd.s32 %s114, 1
    %p118 = scmp.eq.s32.totalorder %s33, 1
    %p119 = scmp.ne.s32.totalorder %s114, %s116
    %p120 = scmp.eq.s32.totalorder %s33, 0
    %p121 = por %p119, %p120
    %p122 = scmp.ne.s32.totalorder %s114, %s116
    %p123 = scmp.eq.s32.totalorder %s38, 1
    %p124 = por %p122, %p123
    %p125 = scmp.ne.s32.totalorder %s116, %s117
    %p126 = scmp.eq.s32.totalorder %s38, 0
    %p127 = por %p125, %p126
    %p128 = scmp.ne.s32.totalorder %s116, %s117
    %p129 = scmp.eq.s32.totalorder %s39, 1
    %p130 = por %p128, %p129
    %p132 = scmp.ne.s32.totalorder %s117, %s131
    %p133 = scmp.eq.s32.totalorder %s39, 0
    %p134 = por %p132, %p133
    %s136 = sadd.s32 %s135, 1
    %p139 = scmp.eq.s32.totalorder %s33, 1
    %p140 = scmp.ne.s32.totalorder %s135, %s137
    %p141 = scmp.eq.s32.totalorder %s33, 0
    %p142 = por %p140, %p141
    %p143 = scmp.ne.s32.totalorder %s135, %s137
    %p144 = scmp.eq.s32.totalorder %s38, 1
    %p145 = por %p143, %p144
    %p146 = scmp.ne.s32.totalorder %s137, %s138
    %p147 = scmp.eq.s32.totalorder %s38, 0
    %p148 = por %p146, %p147
    %p149 = scmp.ne.s32.totalorder %s137, %s138
    %p150 = scmp.eq.s32.totalorder %s39, 1
    %p151 = por %p149, %p150
    %p153 = scmp.ne.s32.totalorder %s138, %s152
    %p154 = scmp.eq.s32.totalorder %s39, 0
    %p155 = por %p153, %p154
    %s157 = sadd.s32 %s156, 1
    %p160 = scmp.eq.s32.totalorder %s33, 1
    %p161 = scmp.ne.s32.totalorder %s156, %s158
    %p162 = scmp.eq.s32.totalorder %s33, 0
    %p163 = por %p161, %p162
    %p164 = scmp.ne.s32.totalorder %s156, %s158
    %p165 = scmp.eq.s32.totalorder %s38, 1
    %p166 = por %p164, %p165
    %p167 = scmp.ne.s32.totalorder %s158, %s159
    %p168 = scmp.eq.s32.totalorder %s38, 0
    %p169 = por %p167, %p168
    %p170 = scmp.ne.s32.totalorder %s158, %s159
    %p171 = scmp.eq.s32.totalorder %s39, 1
    %p172 = por %p170, %p171
    %p174 = scmp.ne.s32.totalorder %s159, %s173
    %p175 = scmp.eq.s32.totalorder %s39, 0
    %p176 = por %p174, %p175
    %s178 = sadd.s32 %s177, 1
    %p181 = scmp.eq.s32.totalorder %s33, 1
    %p182 = scmp.ne.s32.totalorder %s177, %s179
    %p183 = scmp.eq.s32.totalorder %s33, 0
    %p184 = por %p182, %p183
    %p185 = scmp.ne.s32.totalorder %s177, %s179
    %p186 = scmp.eq.s32.totalorder %s38, 1
    %p187 = por %p185, %p186
    %p188 = scmp.ne.s32.totalorder %s179, %s180
    %p189 = scmp.eq.s32.totalorder %s38, 0
    %p190 = por %p188, %p189
    %p191 = scmp.ne.s32.totalorder %s179, %s180
    %p192 = scmp.eq.s32.totalorder %s39, 1
    %p193 = por %p191, %p192
    %p195 = scmp.ne.s32.totalorder %s180, %s194
    %p196 = scmp.eq.s32.totalorder %s39, 0
    %p197 = por %p195, %p196
    %s199 = sadd.s32 %s198, 1
    %p202 = scmp.eq.s32.totalorder %s33, 1
    %p203 = scmp.ne.s32.totalorder %s198, %s200
    %p204 = scmp.eq.s32.totalorder %s33, 0
    %p205 = por %p203, %p204
    %p206 = scmp.ne.s32.totalorder %s198, %s200
    %p207 = scmp.eq.s32.totalorder %s38, 1
    %p208 = por %p206, %p207
    %p209 = scmp.ne.s32.totalorder %s200, %s201
    %p210 = scmp.eq.s32.totalorder %s38, 0
    %p211 = por %p209, %p210
    %p212 = scmp.ne.s32.totalorder %s200, %s201
    %p213 = scmp.eq.s32.totalorder %s39, 1
    %p214 = por %p212, %p213
    %p216 = scmp.ne.s32.totalorder %s201, %s215
    %p217 = scmp.eq.s32.totalorder %s39, 0
    %p218 = por %p216, %p217
    %s220 = sadd.s32 %s219, 1
    %p223 = scmp.eq.s32.totalorder %s33, 1
    %p224 = scmp.ne.s32.totalorder %s219, %s221
    %p225 = scmp.eq.s32.totalorder %s33, 0
    %p226 = por %p224, %p225
    %p227 = scmp.ne.s32.totalorder %s219, %s221
    %p228 = scmp.eq.s32.totalorder %s38, 1
    %p229 = por %p227, %p228
    %p230 = scmp.ne.s32.totalorder %s221, %s222
    %p231 = scmp.eq.s32.totalorder %s38, 0
    %p232 = por %p230, %p231
    %p233 = scmp.ne.s32.totalorder %s221, %s222
    %p234 = scmp.eq.s32.totalorder %s39, 1
    %p235 = por %p233, %p234
    %p237 = scmp.ne.s32.totalorder %s222, %s236
    %p238 = scmp.eq.s32.totalorder %s39, 0
    %p239 = por %p237, %p238
    %s241 = sadd.s32 %s240, 1
    %p244 = scmp.eq.s32.totalorder %s33, 1
    %p245 = scmp.ne.s32.totalorder %s240, %s242
    %p246 = scmp.eq.s32.totalorder %s33, 0
    %p247 = por %p245, %p246
    %p248 = scmp.ne.s32.totalorder %s240, %s242
    %p249 = scmp.eq.s32.totalorder %s38, 1
    %p250 = por %p248, %p249
    %p251 = scmp.ne.s32.totalorder %s242, %s243
    %p252 = scmp.eq.s32.totalorder %s38, 0
    %p253 = por %p251, %p252
    %p254 = scmp.ne.s32.totalorder %s242, %s243
    %p255 = scmp.eq.s32.totalorder %s39, 1
    %p256 = por %p254, %p255
    %p258 = scmp.ne.s32.totalorder %s243, %s257
    %p259 = scmp.eq.s32.totalorder %s39, 0
    %p260 = por %p258, %p259
    %s262 = sadd.s32 %s261, 1
    %p265 = scmp.eq.s32.totalorder %s33, 1
    %p266 = scmp.ne.s32.totalorder %s261, %s263
    %p267 = scmp.eq.s32.totalorder %s33, 0
    %p268 = por %p266, %p267
    %p269 = scmp.ne.s32.totalorder %s261, %s263
    %p270 = scmp.eq.s32.totalorder %s38, 1
    %p271 = por %p269, %p270
    %p272 = scmp.ne.s32.totalorder %s263, %s264
    %p273 = scmp.eq.s32.totalorder %s38, 0
    %p274 = por %p272, %p273
    %p275 = scmp.ne.s32.totalorder %s263, %s264
    %p276 = scmp.eq.s32.totalorder %s39, 1
    %p277 = por %p275, %p276
    %p279 = scmp.ne.s32.totalorder %s264, %s278
    %p280 = scmp.eq.s32.totalorder %s39, 0
    %p281 = por %p279, %p280
    %s283 = sadd.s32 %s282, 1
    %p286 = scmp.eq.s32.totalorder %s33, 1
    %p287 = scmp.ne.s32.totalorder %s282, %s284
    %p288 = scmp.eq.s32.totalorder %s33, 0
    %p289 = por %p287, %p288
    %p290 = scmp.ne.s32.totalorder %s282, %s284
    %p291 = scmp.eq.s32.totalorder %s38, 1
    %p292 = por %p290, %p291
    %p293 = scmp.ne.s32.totalorder %s284, %s285
    %p294 = scmp.eq.s32.totalorder %s38, 0
    %p295 = por %p293, %p294
    %p296 = scmp.ne.s32.totalorder %s284, %s285
    %p297 = scmp.eq.s32.totalorder %s39, 1
    %p298 = por %p296, %p297
    %p300 = scmp.ne.s32.totalorder %s285, %s299
    %p301 = scmp.eq.s32.totalorder %s39, 0
    %p302 = por %p300, %p301
    %s304 = sadd.s32 %s303, 1
    %p307 = scmp.eq.s32.totalorder %s33, 1
    %p308 = scmp.ne.s32.totalorder %s303, %s305
    %p309 = scmp.eq.s32.totalorder %s33, 0
    %p310 = por %p308, %p309
    %p311 = scmp.ne.s32.totalorder %s303, %s305
    %p312 = scmp.eq.s32.totalorder %s38, 1
    %p313 = por %p311, %p312
    %p314 = scmp.ne.s32.totalorder %s305, %s306
    %p315 = scmp.eq.s32.totalorder %s38, 0
    %p316 = por %p314, %p315
    %p317 = scmp.ne.s32.totalorder %s305, %s306
    %p318 = scmp.eq.s32.totalorder %s39, 1
    %p319 = por %p317, %p318
    %p321 = scmp.ne.s32.totalorder %s306, %s320
    %p322 = scmp.eq.s32.totalorder %s39, 0
    %p323 = por %p321, %p322
    %s325 = sadd.s32 %s324, 1
    %p328 = scmp.eq.s32.totalorder %s33, 1
    %p329 = scmp.ne.s32.totalorder %s324, %s326
    %p330 = scmp.eq.s32.totalorder %s33, 0
    %p331 = por %p329, %p330
    %p332 = scmp.ne.s32.totalorder %s324, %s326
    %p333 = scmp.eq.s32.totalorder %s38, 1
    %p334 = por %p332, %p333
    %p335 = scmp.ne.s32.totalorder %s326, %s327
    %p336 = scmp.eq.s32.totalorder %s38, 0
    %p337 = por %p335, %p336
    %p338 = scmp.ne.s32.totalorder %s326, %s327
    %p339 = scmp.eq.s32.totalorder %s39, 1
    %p340 = por %p338, %p339
    %p342 = scmp.ne.s32.totalorder %s327, %s341
    %p343 = scmp.eq.s32.totalorder %s39, 0
    %p344 = por %p342, %p343
    %s346 = sadd.s32 %s345, 1
    %p349 = scmp.eq.s32.totalorder %s33, 1
    %p350 = scmp.ne.s32.totalorder %s345, %s347
    %p351 = scmp.eq.s32.totalorder %s33, 0
    %p352 = por %p350, %p351
    %p353 = scmp.ne.s32.totalorder %s345, %s347
    %p354 = scmp.eq.s32.totalorder %s38, 1
    %p355 = por %p353, %p354
    %p356 = scmp.ne.s32.totalorder %s347, %s348
    %p357 = scmp.eq.s32.totalorder %s38, 0
    %p358 = por %p356, %p357
    %p359 = scmp.ne.s32.totalorder %s347, %s348
    %p360 = scmp.eq.s32.totalorder %s39, 1
    %p361 = por %p359, %p360
    %p363 = scmp.ne.s32.totalorder %s348, %s362
    %p364 = scmp.eq.s32.totalorder %s39, 0
    %p365 = por %p363, %p364
    %s367 = sadd.s32 %s366, 1
    %p370 = scmp.eq.s32.totalorder %s33, 1
    %p371 = scmp.ne.s32.totalorder %s366, %s368
    %p372 = scmp.eq.s32.totalorder %s33, 0
    %p373 = por %p371, %p372
    %p374 = scmp.ne.s32.totalorder %s366, %s368
    %p375 = scmp.eq.s32.totalorder %s38, 1
    %p376 = por %p374, %p375
    %p377 = scmp.ne.s32.totalorder %s368, %s369
    %p378 = scmp.eq.s32.totalorder %s38, 0
    %p379 = por %p377, %p378
    %p380 = scmp.ne.s32.totalorder %s368, %s369
    %p381 = scmp.eq.s32.totalorder %s39, 1
    %p382 = por %p380, %p381
    %p384 = scmp.ne.s32.totalorder %s369, %s383
    %p385 = scmp.eq.s32.totalorder %s39, 0
    %p386 = por %p384, %p385
    %s388 = sadd.s32 %s387, 1
    %p391 = scmp.eq.s32.totalorder %s33, 1
    %p392 = scmp.ne.s32.totalorder %s387, %s389
    %p393 = scmp.eq.s32.totalorder %s33, 0
    %p394 = por %p392, %p393
    %p395 = scmp.ne.s32.totalorder %s387, %s389
    %p396 = scmp.eq.s32.totalorder %s38, 1
    %p397 = por %p395, %p396
    %p398 = scmp.ne.s32.totalorder %s389, %s390
    %p399 = scmp.eq.s32.totalorder %s38, 0
    %p400 = por %p398, %p399
    %p401 = scmp.ne.s32.totalorder %s389, %s390
    %p402 = scmp.eq.s32.totalorder %s39, 1
    %p403 = por %p401, %p402
    %p405 = scmp.ne.s32.totalorder %s390, %s404
    %p406 = scmp.eq.s32.totalorder %s39, 0
    %p407 = por %p405, %p406
    %s409 = sadd.s32 %s408, 1
    %p412 = scmp.eq.s32.totalorder %s33, 1
    %p413 = scmp.ne.s32.totalorder %s408, %s410
    %p414 = scmp.eq.s32.totalorder %s33, 0
    %p415 = por %p413, %p414
    %p416 = scmp.ne.s32.totalorder %s408, %s410
    %p417 = scmp.eq.s32.totalorder %s38, 1
    %p418 = por %p416, %p417
    %p419 = scmp.ne.s32.totalorder %s410, %s411
    %p420 = scmp.eq.s32.totalorder %s38, 0
    %p421 = por %p419, %p420
    %p422 = scmp.ne.s32.totalorder %s410, %s411
    %p423 = scmp.eq.s32.totalorder %s39, 1
    %p424 = por %p422, %p423
    %p426 = scmp.ne.s32.totalorder %s411, %s425
    %p427 = scmp.eq.s32.totalorder %s39, 0
    %p428 = por %p426, %p427
    %s430 = sadd.s32 %s429, 1
    %p433 = scmp.eq.s32.totalorder %s33, 1
    %p434 = scmp.ne.s32.totalorder %s429, %s431
    %p435 = scmp.eq.s32.totalorder %s33, 0
    %p436 = por %p434, %p435
    %p437 = scmp.ne.s32.totalorder %s429, %s431
    %p438 = scmp.eq.s32.totalorder %s38, 1
    %p439 = por %p437, %p438
    %p440 = scmp.ne.s32.totalorder %s431, %s432
    %p441 = scmp.eq.s32.totalorder %s38, 0
    %p442 = por %p440, %p441
    %p443 = scmp.ne.s32.totalorder %s431, %s432
    %p444 = scmp.eq.s32.totalorder %s39, 1
    %p445 = por %p443, %p444
    %p447 = scmp.ne.s32.totalorder %s432, %s446
    %p448 = scmp.eq.s32.totalorder %s39, 0
    %p449 = por %p447, %p448
    %s451 = sadd.s32 %s450, 1
    %p454 = scmp.eq.s32.totalorder %s33, 1
    %p455 = scmp.ne.s32.totalorder %s450, %s452
    %p456 = scmp.eq.s32.totalorder %s33, 0
    %p457 = por %p455, %p456
    %p458 = scmp.ne.s32.totalorder %s450, %s452
    %p459 = scmp.eq.s32.totalorder %s38, 1
    %p460 = por %p458, %p459
    %p461 = scmp.ne.s32.totalorder %s452, %s453
    %p462 = scmp.eq.s32.totalorder %s38, 0
    %p463 = por %p461, %p462
    %p464 = scmp.ne.s32.totalorder %s452, %s453
    %p465 = scmp.eq.s32.totalorder %s39, 1
    %p466 = por %p464, %p465
    %p468 = scmp.ne.s32.totalorder %s453, %s467
    %p469 = scmp.eq.s32.totalorder %s39, 0
    %p470 = por %p468, %p469
    %s472 = sadd.s32 %s471, 1
    %p475 = scmp.eq.s32.totalorder %s33, 1
    %p476 = scmp.ne.s32.totalorder %s471, %s473
    %p477 = scmp.eq.s32.totalorder %s33, 0
    %p478 = por %p476, %p477
    %p479 = scmp.ne.s32.totalorder %s471, %s473
    %p480 = scmp.eq.s32.totalorder %s38, 1
    %p481 = por %p479, %p480
    %p482 = scmp.ne.s32.totalorder %s473, %s474
    %p483 = scmp.eq.s32.totalorder %s38, 0
    %p484 = por %p482, %p483
    %p485 = scmp.ne.s32.totalorder %s473, %s474
    %p486 = scmp.eq.s32.totalorder %s39, 1
    %p487 = por %p485, %p486
    %p489 = scmp.ne.s32.totalorder %s474, %s488
    %p490 = scmp.eq.s32.totalorder %s39, 0
    %p491 = por %p489, %p490
    %s493 = sadd.s32 %s492, 1
    %p496 = scmp.eq.s32.totalorder %s33, 1
    %p497 = scmp.ne.s32.totalorder %s492, %s494
    %p498 = scmp.eq.s32.totalorder %s33, 0
    %p499 = por %p497, %p498
    %p500 = scmp.ne.s32.totalorder %s492, %s494
    %p501 = scmp.eq.s32.totalorder %s38, 1
    %p502 = por %p500, %p501
    %p503 = scmp.ne.s32.totalorder %s494, %s495
    %p504 = scmp.eq.s32.totalorder %s38, 0
    %p505 = por %p503, %p504
    %p506 = scmp.ne.s32.totalorder %s494, %s495
    %p507 = scmp.eq.s32.totalorder %s39, 1
    %p508 = por %p506, %p507
    %p510 = scmp.ne.s32.totalorder %s495, %s509
    %p511 = scmp.eq.s32.totalorder %s39, 0
    %p512 = por %p510, %p511
    %s513 = ssub.s32 %s33, %s40
    %p514 = scmp.eq.s32.totalorder %s513, 0
    %s516 = sadd.s32 %s515, 1
    %s517 = scalar_select %p514, %s515, %s516
    %p520 = pneg %p514
    %p521 = scmp.eq.s32.totalorder %s33, 1
    %p522 = por %p520, %p521
    %p523 = scmp.ne.s32.totalorder %s515, %s518
    %p524 = scmp.eq.s32.totalorder %s33, 0
    %p525 = por %p523, %p524
    %p526 = scmp.ne.s32.totalorder %s515, %s518
    %p527 = scmp.eq.s32.totalorder %s38, 1
    %p528 = por %p526, %p527
    %p529 = scmp.ne.s32.totalorder %s518, %s519
    %p530 = scmp.eq.s32.totalorder %s38, 0
    %p531 = por %p529, %p530
    %p532 = scmp.ne.s32.totalorder %s518, %s519
    %p533 = scmp.eq.s32.totalorder %s39, 1
    %p534 = por %p532, %p533
    %p536 = scmp.ne.s32.totalorder %s519, %s535
    %p537 = scmp.eq.s32.totalorder %s39, 0
    %p538 = por %p536, %p537
    %s539 = ssub.s32 %s33, %s40
    %p540 = scmp.eq.s32.totalorder %s539, 0
    %s542 = sadd.s32 %s541, 1
    %s543 = scalar_select %p540, %s541, %s542
    %p546 = pneg %p540
    %p547 = scmp.eq.s32.totalorder %s33, 1
    %p548 = por %p546, %p547
    %p549 = scmp.ne.s32.totalorder %s541, %s544
    %p550 = scmp.eq.s32.totalorder %s33, 0
    %p551 = por %p549, %p550
    %p552 = scmp.ne.s32.totalorder %s541, %s544
    %p553 = scmp.eq.s32.totalorder %s38, 1
    %p554 = por %p552, %p553
    %p555 = scmp.ne.s32.totalorder %s544, %s545
    %p556 = scmp.eq.s32.totalorder %s38, 0
    %p557 = por %p555, %p556
    %p558 = scmp.ne.s32.totalorder %s544, %s545
    %p559 = scmp.eq.s32.totalorder %s39, 1
    %p560 = por %p558, %p559
    %p562 = scmp.ne.s32.totalorder %s545, %s561
    %p563 = scmp.eq.s32.totalorder %s39, 0
    %p564 = por %p562, %p563
    %s565 = ssub.s32 %s33, %s40
    %p566 = scmp.eq.s32.totalorder %s565, 0
    %s568 = sadd.s32 %s567, 1
    %s569 = scalar_select %p566, %s567, %s568
    %p572 = pneg %p566
    %p573 = scmp.eq.s32.totalorder %s33, 1
    %p574 = por %p572, %p573
    %p575 = scmp.ne.s32.totalorder %s567, %s570
    %p576 = scmp.eq.s32.totalorder %s33, 0
    %p577 = por %p575, %p576
    %p578 = scmp.ne.s32.totalorder %s567, %s570
    %p579 = scmp.eq.s32.totalorder %s38, 1
    %p580 = por %p578, %p579
    %p581 = scmp.ne.s32.totalorder %s570, %s571
    %p582 = scmp.eq.s32.totalorder %s38, 0
    %p583 = por %p581, %p582
    %p584 = scmp.ne.s32.totalorder %s570, %s571
    %p585 = scmp.eq.s32.totalorder %s39, 1
    %p586 = por %p584, %p585
    %p588 = scmp.ne.s32.totalorder %s571, %s587
    %p589 = scmp.eq.s32.totalorder %s39, 0
    %p590 = por %p588, %p589
    %p591 = scmp.le.s32.totalorder 1, %s33
    %p592 = scmp.lt.s32.totalorder %s33, 3
    %p593 = pnand %p591, %p592
    %p594 = pneg %p593
    // Predicated region
    $region9: #{fwd.1} parent=5 // pred_check
      _
    $region10: #{fwd.1} parent=5 // pred_check_branch
      %596 = sbr.rel (%p593) target = $region12
    $region11: #{fwd.1} parent=5 // pred_region
      %s597 = ssub.s32 %s33, 1
      // Predicated region
      $region13: #{fwd.1} parent=11 // pred_check
        %p598 = pneg %p106
      $region14: #{fwd.1} parent=11 // pred_check_branch
        %600 = sbr.rel (%p598) target = $region16
      $region15: #{fwd.1} parent=11 // pred_region
        _
      $region16: #{fwd.1} parent=11 // pred_fallthru
        _
      // Predicated region
      $region17: #{fwd.1} parent=11 // pred_check
        %p601 = pneg %p127
      $region18: #{fwd.1} parent=11 // pred_check_branch
        %603 = sbr.rel (%p601) target = $region20
      $region19: #{fwd.1} parent=11 // pred_region
        _
      $region20: #{fwd.1} parent=11 // pred_fallthru
        _
      // Predicated region
      $region21: #{fwd.1} parent=11 // pred_check
        %p604 = pneg %p148
      $region22: #{fwd.1} parent=11 // pred_check_branch
        %606 = sbr.rel (%p604) target = $region24
      $region23: #{fwd.1} parent=11 // pred_region
        _
      $region24: #{fwd.1} parent=11 // pred_fallthru
        _
      // Predicated region
      $region25: #{fwd.1} parent=11 // pred_check
        %p607 = pneg %p169
      $region26: #{fwd.1} parent=11 // pred_check_branch
        %609 = sbr.rel (%p607) target = $region28
      $region27: #{fwd.1} parent=11 // pred_region
        _
      $region28: #{fwd.1} parent=11 // pred_fallthru
        _
      // Predicated region
      $region29: #{fwd.1} parent=11 // pred_check
        %p610 = pneg %p190
      $region30: #{fwd.1} parent=11 // pred_check_branch
        %612 = sbr.rel (%p610) target = $region32
      $region31: #{fwd.1} parent=11 // pred_region
        _
      $region32: #{fwd.1} parent=11 // pred_fallthru
        _
      // Predicated region
      $region33: #{fwd.1} parent=11 // pred_check
        %p613 = pneg %p211
      $region34: #{fwd.1} parent=11 // pred_check_branch
        %615 = sbr.rel (%p613) target = $region36
      $region35: #{fwd.1} parent=11 // pred_region
        _
      $region36: #{fwd.1} parent=11 // pred_fallthru
        _
      // Predicated region
      $region37: #{fwd.1} parent=11 // pred_check
        %p616 = pneg %p232
      $region38: #{fwd.1} parent=11 // pred_check_branch
        %618 = sbr.rel (%p616) target = $region40
      $region39: #{fwd.1} parent=11 // pred_region
        _
      $region40: #{fwd.1} parent=11 // pred_fallthru
        _
      // Predicated region
      $region41: #{fwd.1} parent=11 // pred_check
        %p619 = pneg %p253
      $region42: #{fwd.1} parent=11 // pred_check_branch
        %621 = sbr.rel (%p619) target = $region44
      $region43: #{fwd.1} parent=11 // pred_region
        _
      $region44: #{fwd.1} parent=11 // pred_fallthru
        _
      // Predicated region
      $region45: #{fwd.1} parent=11 // pred_check
        %p622 = pneg %p274
      $region46: #{fwd.1} parent=11 // pred_check_branch
        %624 = sbr.rel (%p622) target = $region48
      $region47: #{fwd.1} parent=11 // pred_region
        _
      $region48: #{fwd.1} parent=11 // pred_fallthru
        _
      // Predicated region
      $region49: #{fwd.1} parent=11 // pred_check
        %p625 = pneg %p295
      $region50: #{fwd.1} parent=11 // pred_check_branch
        %627 = sbr.rel (%p625) target = $region52
      $region51: #{fwd.1} parent=11 // pred_region
        _
      $region52: #{fwd.1} parent=11 // pred_fallthru
        _
      // Predicated region
      $region53: #{fwd.1} parent=11 // pred_check
        %p628 = pneg %p316
      $region54: #{fwd.1} parent=11 // pred_check_branch
        %630 = sbr.rel (%p628) target = $region56
      $region55: #{fwd.1} parent=11 // pred_region
        _
      $region56: #{fwd.1} parent=11 // pred_fallthru
        _
      // Predicated region
      $region57: #{fwd.1} parent=11 // pred_check
        %p631 = pneg %p337
      $region58: #{fwd.1} parent=11 // pred_check_branch
        %633 = sbr.rel (%p631) target = $region60
      $region59: #{fwd.1} parent=11 // pred_region
        _
      $region60: #{fwd.1} parent=11 // pred_fallthru
        _
      // Predicated region
      $region61: #{fwd.1} parent=11 // pred_check
        %p634 = pneg %p358
      $region62: #{fwd.1} parent=11 // pred_check_branch
        %636 = sbr.rel (%p634) target = $region64
      $region63: #{fwd.1} parent=11 // pred_region
        _
      $region64: #{fwd.1} parent=11 // pred_fallthru
        _
      // Predicated region
      $region65: #{fwd.1} parent=11 // pred_check
        %p637 = pneg %p379
      $region66: #{fwd.1} parent=11 // pred_check_branch
        %639 = sbr.rel (%p637) target = $region68
      $region67: #{fwd.1} parent=11 // pred_region
        _
      $region68: #{fwd.1} parent=11 // pred_fallthru
        _
      // Predicated region
      $region69: #{fwd.1} parent=11 // pred_check
        %p640 = pneg %p400
      $region70: #{fwd.1} parent=11 // pred_check_branch
        %642 = sbr.rel (%p640) target = $region72
      $region71: #{fwd.1} parent=11 // pred_region
        _
      $region72: #{fwd.1} parent=11 // pred_fallthru
        _
      // Predicated region
      $region73: #{fwd.1} parent=11 // pred_check
        %p643 = pneg %p421
      $region74: #{fwd.1} parent=11 // pred_check_branch
        %645 = sbr.rel (%p643) target = $region76
      $region75: #{fwd.1} parent=11 // pred_region
        _
      $region76: #{fwd.1} parent=11 // pred_fallthru
        _
      // Predicated region
      $region77: #{fwd.1} parent=11 // pred_check
        %p646 = pneg %p442
      $region78: #{fwd.1} parent=11 // pred_check_branch
        %648 = sbr.rel (%p646) target = $region80
      $region79: #{fwd.1} parent=11 // pred_region
        _
      $region80: #{fwd.1} parent=11 // pred_fallthru
        _
      // Predicated region
      $region81: #{fwd.1} parent=11 // pred_check
        %p649 = pneg %p463
      $region82: #{fwd.1} parent=11 // pred_check_branch
        %651 = sbr.rel (%p649) target = $region84
      $region83: #{fwd.1} parent=11 // pred_region
        _
      $region84: #{fwd.1} parent=11 // pred_fallthru
        _
      // Predicated region
      $region85: #{fwd.1} parent=11 // pred_check
        %p652 = pneg %p484
      $region86: #{fwd.1} parent=11 // pred_check_branch
        %654 = sbr.rel (%p652) target = $region88
      $region87: #{fwd.1} parent=11 // pred_region
        _
      $region88: #{fwd.1} parent=11 // pred_fallthru
        _
      // Predicated region
      $region89: #{fwd.1} parent=11 // pred_check
        %p655 = pneg %p505
      $region90: #{fwd.1} parent=11 // pred_check_branch
        %657 = sbr.rel (%p655) target = $region92
      $region91: #{fwd.1} parent=11 // pred_region
        _
      $region92: #{fwd.1} parent=11 // pred_fallthru
        _
    $region12: #{fwd.1} parent=5 // pred_fallthru
      _
    %p658 = scmp.lt.s32.totalorder %s33, 2
    // Predicated region
    $region93: #{fwd.1} parent=5 // pred_check
      %p659 = pneg %p658
    $region94: #{fwd.1} parent=5 // pred_check_branch
      %661 = sbr.rel (%p659) target = $region96
    $region95: #{fwd.1} parent=5 // pred_region
      // Predicated region
      $region97: #{fwd.1} parent=95 // pred_check
        %p662 = pneg %p53
      $region98: #{fwd.1} parent=95 // pred_check_branch
        %664 = sbr.rel (%p662) target = $region100
      $region99: #{fwd.1} parent=95 // pred_region
        %p665 = scmp.lt.s32.totalorder %s33, 1
        %s666 = scalar_select %p665, %s33, 1
        %s667 = smul.addr %s666, 6
        %s668 = smul.addr %s667, 8
        %s669 = scalar_lea.vmem %s0, %s668
      $region100: #{fwd.1} parent=95 // pred_fallthru
        _
      // Predicated region
      $region101: #{fwd.1} parent=95 // pred_check
        %p670 = pneg %p79
      $region102: #{fwd.1} parent=95 // pred_check_branch
        %672 = sbr.rel (%p670) target = $region104
      $region103: #{fwd.1} parent=95 // pred_region
        %p673 = scmp.lt.s32.totalorder %s33, 1
        %s674 = scalar_select %p673, %s33, 1
        %s675 = smul.addr %s674, 2
        %s676 = scalar_lea.vmem %s1, %s675
      $region104: #{fwd.1} parent=95 // pred_fallthru
        _
    $region96: #{fwd.1} parent=5 // pred_fallthru
      _
    %p677 = scmp.le.s32.totalorder 1, %s33
    %p678 = scmp.lt.s32.totalorder %s33, 3
    %p679 = pnand %p677, %p678
    %p680 = pneg %p679
    // Predicated region
    $region105: #{fwd.1} parent=5 // pred_check
      _
    $region106: #{fwd.1} parent=5 // pred_check_branch
      %682 = sbr.rel (%p679) target = $region108
    $region107: #{fwd.1} parent=5 // pred_region
      %s683 = ssub.s32 %s33, 1
      %p684 = scmp.lt.s32.totalorder %s38, 1
      %s685 = scalar_select %p684, %s38, 1
      %s686 = smul.addr %s685, 6
      %s687 = smul.addr %s686, 8
      %s688 = scalar_lea.vmem %s0, %s687
      %p689 = pneg %p59
      %p690 = pneg %p56
      %p691 = scmp.lt.s32.totalorder %s38, 1
      %s692 = scalar_select %p691, %s38, 1
      %s693 = smul.addr %s692, 2
      %s694 = scalar_lea.vmem %s1, %s693
      %p695 = pneg %p85
      %p696 = pneg %p82
      %p697 = pneg %p106
      %p698 = pneg %p103
      %p699 = pneg %p127
      %p700 = pneg %p124
      %p701 = pneg %p148
      %p702 = pneg %p145
      %p703 = pneg %p169
      %p704 = pneg %p166
      %p705 = pneg %p190
      %p706 = pneg %p187
      %p707 = pneg %p211
      %p708 = pneg %p208
      %p709 = pneg %p232
      %p710 = pneg %p229
      %p711 = pneg %p253
      %p712 = pneg %p250
      %p713 = pneg %p274
      %p714 = pneg %p271
      %p715 = pneg %p295
      %p716 = pneg %p292
      %p717 = pneg %p316
      %p718 = pneg %p313
      %p719 = pneg %p337
      %p720 = pneg %p334
      %p721 = pneg %p358
      %p722 = pneg %p355
      %p723 = pneg %p379
      %p724 = pneg %p376
      %p725 = pneg %p400
      %p726 = pneg %p397
      %p727 = pneg %p421
      %p728 = pneg %p418
      %p729 = pneg %p442
      %p730 = pneg %p439
      %p731 = pneg %p463
      %p732 = pneg %p460
      %p733 = pneg %p484
      %p734 = pneg %p481
      %p735 = pneg %p505
      %p736 = pneg %p502
      %p737 = pneg %p531
      %p738 = pneg %p528
      %p739 = scmp.lt.s32.totalorder %s38, 1
      %s740 = scalar_select %p739, %s38, 1
      %s741 = smul.addr %s740, 2
      %s742 = smul.addr %s741, 8
      %s743 = scalar_lea.vmem %s22, %s742
      %p744 = pneg %p557
      %p745 = pneg %p554
      %p746 = scmp.lt.s32.totalorder %s38, 1
      %s747 = scalar_select %p746, %s38, 1
      %s748 = smul.addr %s747, 8
      %s749 = scalar_lea.vmem %s23, %s748
      %p750 = pneg %p583
      %p751 = pneg %p580
      %p752 = scmp.lt.s32.totalorder %s38, 1
      %s753 = scalar_select %p752, %s38, 1
      %s754 = smul.addr %s753, 2
      %s755 = scalar_lea.vmem %s24, %s754
      %p756 = scmp.lt.s32.totalorder %s38, 1
      %s757 = scalar_select %p756, %s38, 1
      %s758 = smul.addr %s757, 6
      %s759 = smul.addr %s758, 8
      %s760 = scalar_lea.vmem %s0, %s759
      %p761 = scmp.lt.s32.totalorder %s38, 1
      %s762 = scalar_select %p761, %s38, 1
      %s763 = smul.addr %s762, 2
      %s764 = scalar_lea.vmem %s1, %s763
      %p765 = scmp.lt.s32.totalorder %s38, 1
      %s766 = scalar_select %p765, %s38, 1
      %s767 = smul.addr %s766, 2
      %s768 = smul.addr %s767, 8
      %s769 = scalar_lea.vmem %s22, %s768
      %p770 = scmp.lt.s32.totalorder %s38, 1
      %s771 = scalar_select %p770, %s38, 1
      %s772 = smul.addr %s771, 8
      %s773 = scalar_lea.vmem %s23, %s772
      %p774 = scmp.lt.s32.totalorder %s38, 1
      %s775 = scalar_select %p774, %s38, 1
      %s776 = smul.addr %s775, 2
      %s777 = scalar_lea.vmem %s24, %s776
      %v778 = vld [vmem:[%s760] sm:$0xff]
      %v779 = vld [vmem:[%s760 + $0x8] sm:$0xff]
      %v780 = vld [vmem:[%s760 + $0x10] sm:$0x3]
      %v781 = vld [vmem:[%s760 + $0x18] sm:$0xff]
      %v782 = vld [vmem:[%s760 + $0x20] sm:$0xff]
      %v783 = vld [vmem:[%s760 + $0x28] sm:$0x3]
      %v784 = vld [vmem:[%s764] sm:$0x3]
      %v785 = vld [vmem:[%s2] sm:$0xff]
      %v786 = vld [vmem:[%s2 + $0x8] sm:$0xff]
      %v787 = vld [vmem:[%s2 + $0x10] sm:$0xff]
      %v788 = vld [vmem:[%s2 + $0x18] sm:$0xff]
      %v789 = vld [vmem:[%s2 + $0x20] sm:$0xff]
      %v790 = vld [vmem:[%s2 + $0x28] sm:$0xff]
      %v791 = vld [vmem:[%s2 + $0x30] sm:$0xff]
      %v792 = vld [vmem:[%s2 + $0x38] sm:$0xff]
      %v793 = vld [vmem:[%s2 + $0x40] sm:$0xff]
      %v794 = vld [vmem:[%s2 + $0x48] sm:$0xff]
      %v795 = vld [vmem:[%s2 + $0x50] sm:$0xff]
      %v796 = vld [vmem:[%s2 + $0x58] sm:$0xff]
      %vm803 = vcmask 1046528
      %v804 = vrot.slane %v778, 1
      %v805 = vrot.slane %v779, 1
      %v806 = vsel %vm803, %v804, %v805
      %v807 = vrot.slane %v780, 1
      %v808 = vsel %vm803, %v805, %v807
      %v809 = vrot.slane %v781, 1
      %v810 = vrot.slane %v782, 1
      %v811 = vsel %vm803, %v809, %v810
      %v812 = vrot.slane %v783, 1
      %v813 = vsel %vm803, %v810, %v812
      %s814 = scalar_lea.vmem %s2, 96
      %v815 = vld [vmem:[%s814] sm:$0xff]
      %v816 = vld [vmem:[%s814 + $0x8] sm:$0xff]
      %v817 = vld [vmem:[%s814 + $0x10] sm:$0xff]
      %v818 = vld [vmem:[%s814 + $0x18] sm:$0xff]
      %v819 = vld [vmem:[%s814 + $0x20] sm:$0xff]
      %v820 = vld [vmem:[%s814 + $0x28] sm:$0xff]
      %v821 = vld [vmem:[%s814 + $0x30] sm:$0xff]
      %v822 = vld [vmem:[%s814 + $0x38] sm:$0xff]
      %v823 = vld [vmem:[%s814 + $0x40] sm:$0xff]
      %v824 = vld [vmem:[%s814 + $0x48] sm:$0xff]
      %v825 = vld [vmem:[%s814 + $0x50] sm:$0xff]
      %v826 = vld [vmem:[%s814 + $0x58] sm:$0xff]
      %vm827 = vcmask 785408
      %v828 = vsel %vm827, %v806, 0
      %v830 = vsel %vm827, %v808, 0
      %v832 = vsel %vm827, %v811, 0
      %v834 = vsel %vm827, %v813, 0
      %836 = vmatpush.msra.mxu0 0.0
      %837 = vmatpush.msra.mxu0 0.0
      %838 = vmatpush.msra.mxu0 0.0
      %839 = vmatpush.msra.mxu0 0.0
      %840 = vmatpush.msra.mxu0 %v826
      %841 = vmatpush.msra.mxu0 %v825
      %842 = vmatpush.msra.mxu0 %v824
      %843 = vmatpush.msra.mxu0 %v823
      %844 = vmatpush.msra.mxu0 %v822
      %845 = vmatpush.msra.mxu0 %v821
      %846 = vmatpush.msra.mxu0 %v820
      %847 = vmatpush.msra.mxu0 %v819
      %848 = vmatpush.msra.mxu0 %v818
      %849 = vmatpush.msra.mxu0 %v817
      %850 = vmatpush.msra.mxu0 %v816
      %851 = vmatpush.msra.mxu0 %v815
      %852 = vmatmul.f32.gmra.mxu0 %v828
      %v853 = vpop.f32.mrf.mxu0
      %v854 = vadd.f32 0.0, %v853
      %855 = vmatmul.f32.gmra.mxu0 %v830
      %v856 = vpop.f32.mrf.mxu0
      %v857 = vadd.f32 0.0, %v856
      %858 = vmatmul.f32.gmra.mxu0 %v832
      %v859 = vpop.f32.mrf.mxu0
      %v860 = vadd.f32 0.0, %v859
      %861 = vmatmul.f32.gmra.mxu0 %v834
      %v862 = vpop.f32.mrf.mxu0
      %v863 = vadd.f32 0.0, %v862
      %864 = vdwg.mxu0
      %v865 = vsel %vm827, %v778, 0
      %v867 = vsel %vm827, %v779, 0
      %v869 = vsel %vm827, %v781, 0
      %v871 = vsel %vm827, %v782, 0
      %873 = vmatpush.msra.mxu0 0.0
      %874 = vmatpush.msra.mxu0 0.0
      %875 = vmatpush.msra.mxu0 0.0
      %876 = vmatpush.msra.mxu0 0.0
      %877 = vmatpush.msra.mxu0 %v796
      %878 = vmatpush.msra.mxu0 %v795
      %879 = vmatpush.msra.mxu0 %v794
      %880 = vmatpush.msra.mxu0 %v793
      %881 = vmatpush.msra.mxu0 %v792
      %882 = vmatpush.msra.mxu0 %v791
      %883 = vmatpush.msra.mxu0 %v790
      %884 = vmatpush.msra.mxu0 %v789
      %885 = vmatpush.msra.mxu0 %v788
      %886 = vmatpush.msra.mxu0 %v787
      %887 = vmatpush.msra.mxu0 %v786
      %888 = vmatpush.msra.mxu0 %v785
      %889 = vmatmul.f32.gmra.mxu0 %v865
      %v890 = vpop.f32.mrf.mxu0
      %v891 = vadd.f32 %v854, %v890
      %892 = vmatmul.f32.gmra.mxu0 %v867
      %v893 = vpop.f32.mrf.mxu0
      %v894 = vadd.f32 %v857, %v893
      %895 = vmatmul.f32.gmra.mxu0 %v869
      %v896 = vpop.f32.mrf.mxu0
      %v897 = vadd.f32 %v860, %v896
      %898 = vmatmul.f32.gmra.mxu0 %v871
      %v899 = vpop.f32.mrf.mxu0
      %v900 = vadd.f32 %v863, %v899
      %901 = vdwg.mxu0
      %vm902 = vcmask 1045504
      %v903 = vrot.slane %v778, 2
      %v904 = vrot.slane %v779, 2
      %v905 = vsel %vm902, %v903, %v904
      %v906 = vrot.slane %v780, 2
      %v907 = vsel %vm902, %v904, %v906
      %v908 = vrot.slane %v781, 2
      %v909 = vrot.slane %v782, 2
      %v910 = vsel %vm902, %v908, %v909
      %v911 = vrot.slane %v783, 2
      %v912 = vsel %vm902, %v909, %v911
      %s913 = scalar_lea.vmem %s2, 192
      %v914 = vld [vmem:[%s913] sm:$0xff]
      %v915 = vld [vmem:[%s913 + $0x8] sm:$0xff]
      %v916 = vld [vmem:[%s913 + $0x10] sm:$0xff]
      %v917 = vld [vmem:[%s913 + $0x18] sm:$0xff]
      %v918 = vld [vmem:[%s913 + $0x20] sm:$0xff]
      %v919 = vld [vmem:[%s913 + $0x28] sm:$0xff]
      %v920 = vld [vmem:[%s913 + $0x30] sm:$0xff]
      %v921 = vld [vmem:[%s913 + $0x38] sm:$0xff]
      %v922 = vld [vmem:[%s913 + $0x40] sm:$0xff]
      %v923 = vld [vmem:[%s913 + $0x48] sm:$0xff]
      %v924 = vld [vmem:[%s913 + $0x50] sm:$0xff]
      %v925 = vld [vmem:[%s913 + $0x58] sm:$0xff]
      %v926 = vsel %vm827, %v905, 0
      %v928 = vsel %vm827, %v907, 0
      %v930 = vsel %vm827, %v910, 0
      %v932 = vsel %vm827, %v912, 0
      %934 = vmatpush.msra.mxu0 0.0
      %935 = vmatpush.msra.mxu0 0.0
      %936 = vmatpush.msra.mxu0 0.0
      %937 = vmatpush.msra.mxu0 0.0
      %938 = vmatpush.msra.mxu0 %v925
      %939 = vmatpush.msra.mxu0 %v924
      %940 = vmatpush.msra.mxu0 %v923
      %941 = vmatpush.msra.mxu0 %v922
      %942 = vmatpush.msra.mxu0 %v921
      %943 = vmatpush.msra.mxu0 %v920
      %944 = vmatpush.msra.mxu0 %v919
      %945 = vmatpush.msra.mxu0 %v918
      %946 = vmatpush.msra.mxu0 %v917
      %947 = vmatpush.msra.mxu0 %v916
      %948 = vmatpush.msra.mxu0 %v915
      %949 = vmatpush.msra.mxu0 %v914
      %950 = vmatmul.f32.gmra.mxu0 %v926
      %v951 = vpop.f32.mrf.mxu0
      %v952 = vadd.f32 0.0, %v951
      %953 = vmatmul.f32.gmra.mxu0 %v928
      %v954 = vpop.f32.mrf.mxu0
      %v955 = vadd.f32 0.0, %v954
      %956 = vmatmul.f32.gmra.mxu0 %v930
      %v957 = vpop.f32.mrf.mxu0
      %v958 = vadd.f32 0.0, %v957
      %959 = vmatmul.f32.gmra.mxu0 %v932
      %v960 = vpop.f32.mrf.mxu0
      %v961 = vadd.f32 0.0, %v960
      %962 = vdwg.mxu0
      %v963 = vadd.f32 %v891, %v952
      %v964 = vadd.f32 %v894, %v955
      %v965 = vadd.f32 %v897, %v958
      %v966 = vadd.f32 %v900, %v961
      %v967 = vld [vmem:[%s3] sm:$0x1]
      %v969 = vperm.slane %v967, 0
      %v971 = vadd.f32 %v963, %v969
      %v972 = vadd.f32 %v964, %v969
      %v973 = vadd.f32 %v965, %v969
      %v974 = vadd.f32 %v966, %v969
      %v975 = vmax.f32 %v971, 0.0
      %v976 = vmax.f32 %v972, 0.0
      %v977 = vmax.f32 %v973, 0.0
      %v978 = vmax.f32 %v974, 0.0
      %979 = vst [vmem:[#allocation2] sm:$0xff] 0.0
      %980 = vst [vmem:[#allocation2 + $0x8] sm:$0xff] 0.0
      %981 = vst [vmem:[#allocation2 + $0x10] sm:$0x3] 0.0
      %982 = vst [vmem:[#allocation2 + $0x18] sm:$0xff] 0.0
      %983 = vst [vmem:[#allocation2 + $0x20] sm:$0xff] 0.0
      %984 = vst [vmem:[#allocation2 + $0x28] sm:$0x3] 0.0
      %985 = vst [vmem:[#allocation2 + $0x1] sm:$0xff] %v975
      %986 = vst [vmem:[#allocation2 + $0x9] sm:$0xff] %v976
      %987 = vst [vmem:[#allocation2 + $0x19] sm:$0xff] %v977
      %988 = vst [vmem:[#allocation2 + $0x21] sm:$0xff] %v978
      %v989 = vld [vmem:[#allocation2] sm:$0xff]
      %v990 = vld [vmem:[#allocation2 + $0x8] sm:$0xff]
      %v991 = vld [vmem:[#allocation2 + $0x10] sm:$0x3]
      %v992 = vld [vmem:[#allocation2 + $0x18] sm:$0xff]
      %v993 = vld [vmem:[#allocation2 + $0x20] sm:$0xff]
      %v994 = vld [vmem:[#allocation2 + $0x28] sm:$0x3]
      %v995 = vld [vmem:[%s4] sm:$0xff]
      %v996 = vld [vmem:[%s4 + $0x8] sm:$0xff]
      %v997 = vld [vmem:[%s4 + $0x10] sm:$0xff]
      %v998 = vld [vmem:[%s4 + $0x18] sm:$0xff]
      %v999 = vld [vmem:[%s4 + $0x20] sm:$0xff]
      %v1000 = vld [vmem:[%s4 + $0x28] sm:$0xff]
      %v1001 = vld [vmem:[%s4 + $0x30] sm:$0xff]
      %v1002 = vld [vmem:[%s4 + $0x38] sm:$0xff]
      %v1003 = vld [vmem:[%s4 + $0x40] sm:$0xff]
      %v1004 = vld [vmem:[%s4 + $0x48] sm:$0xff]
      %v1005 = vld [vmem:[%s4 + $0x50] sm:$0xff]
      %v1006 = vld [vmem:[%s4 + $0x58] sm:$0xff]
      %v1007 = vld [vmem:[%s4 + $0x60] sm:$0xff]
      %v1008 = vld [vmem:[%s4 + $0x68] sm:$0xff]
      %v1009 = vld [vmem:[%s4 + $0x70] sm:$0xff]
      %v1010 = vld [vmem:[%s4 + $0x78] sm:$0xff]
      %v1017 = vrot.slane %v989, 1
      %v1018 = vrot.slane %v990, 1
      %v1019 = vsel %vm803, %v1017, %v1018
      %v1020 = vrot.slane %v991, 1
      %v1021 = vsel %vm803, %v1018, %v1020
      %v1022 = vrot.slane %v992, 1
      %v1023 = vrot.slane %v993, 1
      %v1024 = vsel %vm803, %v1022, %v1023
      %v1025 = vrot.slane %v994, 1
      %v1026 = vsel %vm803, %v1023, %v1025
      %s1031 = scalar_lea.vmem %s4, 128
      %v1032 = vld [vmem:[%s1031] sm:$0xff]
      %v1033 = vld [vmem:[%s1031 + $0x8] sm:$0xff]
      %v1034 = vld [vmem:[%s1031 + $0x10] sm:$0xff]
      %v1035 = vld [vmem:[%s1031 + $0x18] sm:$0xff]
      %v1036 = vld [vmem:[%s1031 + $0x20] sm:$0xff]
      %v1037 = vld [vmem:[%s1031 + $0x28] sm:$0xff]
      %v1038 = vld [vmem:[%s1031 + $0x30] sm:$0xff]
      %v1039 = vld [vmem:[%s1031 + $0x38] sm:$0xff]
      %v1040 = vld [vmem:[%s1031 + $0x40] sm:$0xff]
      %v1041 = vld [vmem:[%s1031 + $0x48] sm:$0xff]
      %v1042 = vld [vmem:[%s1031 + $0x50] sm:$0xff]
      %v1043 = vld [vmem:[%s1031 + $0x58] sm:$0xff]
      %v1044 = vld [vmem:[%s1031 + $0x60] sm:$0xff]
      %v1045 = vld [vmem:[%s1031 + $0x68] sm:$0xff]
      %v1046 = vld [vmem:[%s1031 + $0x70] sm:$0xff]
      %v1047 = vld [vmem:[%s1031 + $0x78] sm:$0xff]
      %1048 = vmatpush.msra.mxu0 %v1047
      %1049 = vmatpush.msra.mxu0 %v1046
      %1050 = vmatpush.msra.mxu0 %v1045
      %1051 = vmatpush.msra.mxu0 %v1044
      %1052 = vmatpush.msra.mxu0 %v1043
      %1053 = vmatpush.msra.mxu0 %v1042
      %1054 = vmatpush.msra.mxu0 %v1041
      %1055 = vmatpush.msra.mxu0 %v1040
      %1056 = vmatpush.msra.mxu0 %v1039
      %1057 = vmatpush.msra.mxu0 %v1038
      %1058 = vmatpush.msra.mxu0 %v1037
      %1059 = vmatpush.msra.mxu0 %v1036
      %1060 = vmatpush.msra.mxu0 %v1035
      %1061 = vmatpush.msra.mxu0 %v1034
      %1062 = vmatpush.msra.mxu0 %v1033
      %1063 = vmatpush.msra.mxu0 %v1032
      %1064 = vmatmul.f32.gmra.mxu0 %v1019
      %v1065 = vpop.f32.mrf.mxu0
      %v1066 = vadd.f32 0.0, %v1065
      %1067 = vmatmul.f32.gmra.mxu0 %v1021
      %v1068 = vpop.f32.mrf.mxu0
      %v1069 = vadd.f32 0.0, %v1068
      %1070 = vmatmul.f32.gmra.mxu0 %v1024
      %v1071 = vpop.f32.mrf.mxu0
      %v1072 = vadd.f32 0.0, %v1071
      %1073 = vmatmul.f32.gmra.mxu0 %v1026
      %v1074 = vpop.f32.mrf.mxu0
      %v1075 = vadd.f32 0.0, %v1074
      %1076 = vdwg.mxu0
      %1077 = vmatpush.msra.mxu0 %v1010
      %1078 = vmatpush.msra.mxu0 %v1009
      %1079 = vmatpush.msra.mxu0 %v1008
      %1080 = vmatpush.msra.mxu0 %v1007
      %1081 = vmatpush.msra.mxu0 %v1006
      %1082 = vmatpush.msra.mxu0 %v1005
      %1083 = vmatpush.msra.mxu0 %v1004
      %1084 = vmatpush.msra.mxu0 %v1003
      %1085 = vmatpush.msra.mxu0 %v1002
      %1086 = vmatpush.msra.mxu0 %v1001
      %1087 = vmatpush.msra.mxu0 %v1000
      %1088 = vmatpush.msra.mxu0 %v999
      %1089 = vmatpush.msra.mxu0 %v998
      %1090 = vmatpush.msra.mxu0 %v997
      %1091 = vmatpush.msra.mxu0 %v996
      %1092 = vmatpush.msra.mxu0 %v995
      %1093 = vmatmul.f32.gmra.mxu0 %v989
      %v1094 = vpop.f32.mrf.mxu0
      %v1095 = vadd.f32 %v1066, %v1094
      %1096 = vmatmul.f32.gmra.mxu0 %v990
      %v1097 = vpop.f32.mrf.mxu0
      %v1098 = vadd.f32 %v1069, %v1097
      %1099 = vmatmul.f32.gmra.mxu0 %v992
      %v1100 = vpop.f32.mrf.mxu0
      %v1101 = vadd.f32 %v1072, %v1100
      %1102 = vmatmul.f32.gmra.mxu0 %v993
      %v1103 = vpop.f32.mrf.mxu0
      %v1104 = vadd.f32 %v1075, %v1103
      %1105 = vdwg.mxu0
      %v1106 = vrot.slane %v989, 2
      %v1107 = vrot.slane %v990, 2
      %v1108 = vsel %vm902, %v1106, %v1107
      %v1109 = vrot.slane %v991, 2
      %v1110 = vsel %vm902, %v1107, %v1109
      %v1111 = vrot.slane %v992, 2
      %v1112 = vrot.slane %v993, 2
      %v1113 = vsel %vm902, %v1111, %v1112
      %v1114 = vrot.slane %v994, 2
      %v1115 = vsel %vm902, %v1112, %v1114
      %s1120 = scalar_lea.vmem %s4, 256
      %v1121 = vld [vmem:[%s1120] sm:$0xff]
      %v1122 = vld [vmem:[%s1120 + $0x8] sm:$0xff]
      %v1123 = vld [vmem:[%s1120 + $0x10] sm:$0xff]
      %v1124 = vld [vmem:[%s1120 + $0x18] sm:$0xff]
      %v1125 = vld [vmem:[%s1120 + $0x20] sm:$0xff]
      %v1126 = vld [vmem:[%s1120 + $0x28] sm:$0xff]
      %v1127 = vld [vmem:[%s1120 + $0x30] sm:$0xff]
      %v1128 = vld [vmem:[%s1120 + $0x38] sm:$0xff]
      %v1129 = vld [vmem:[%s1120 + $0x40] sm:$0xff]
      %v1130 = vld [vmem:[%s1120 + $0x48] sm:$0xff]
      %v1131 = vld [vmem:[%s1120 + $0x50] sm:$0xff]
      %v1132 = vld [vmem:[%s1120 + $0x58] sm:$0xff]
      %v1133 = vld [vmem:[%s1120 + $0x60] sm:$0xff]
      %v1134 = vld [vmem:[%s1120 + $0x68] sm:$0xff]
      %v1135 = vld [vmem:[%s1120 + $0x70] sm:$0xff]
      %v1136 = vld [vmem:[%s1120 + $0x78] sm:$0xff]
      %1137 = vmatpush.msra.mxu0 %v1136
      %1138 = vmatpush.msra.mxu0 %v1135
      %1139 = vmatpush.msra.mxu0 %v1134
      %1140 = vmatpush.msra.mxu0 %v1133
      %1141 = vmatpush.msra.mxu0 %v1132
      %1142 = vmatpush.msra.mxu0 %v1131
      %1143 = vmatpush.msra.mxu0 %v1130
      %1144 = vmatpush.msra.mxu0 %v1129
      %1145 = vmatpush.msra.mxu0 %v1128
      %1146 = vmatpush.msra.mxu0 %v1127
      %1147 = vmatpush.msra.mxu0 %v1126
      %1148 = vmatpush.msra.mxu0 %v1125
      %1149 = vmatpush.msra.mxu0 %v1124
      %1150 = vmatpush.msra.mxu0 %v1123
      %1151 = vmatpush.msra.mxu0 %v1122
      %1152 = vmatpush.msra.mxu0 %v1121
      %1153 = vmatmul.f32.gmra.mxu0 %v1108
      %v1154 = vpop.f32.mrf.mxu0
      %v1155 = vadd.f32 0.0, %v1154
      %1156 = vmatmul.f32.gmra.mxu0 %v1110
      %v1157 = vpop.f32.mrf.mxu0
      %v1158 = vadd.f32 0.0, %v1157
      %1159 = vmatmul.f32.gmra.mxu0 %v1113
      %v1160 = vpop.f32.mrf.mxu0
      %v1161 = vadd.f32 0.0, %v1160
      %1162 = vmatmul.f32.gmra.mxu0 %v1115
      %v1163 = vpop.f32.mrf.mxu0
      %v1164 = vadd.f32 0.0, %v1163
      %1165 = vdwg.mxu0
      %v1166 = vadd.f32 %v1095, %v1155
      %v1167 = vadd.f32 %v1098, %v1158
      %v1168 = vadd.f32 %v1101, %v1161
      %v1169 = vadd.f32 %v1104, %v1164
      %v1170 = vld [vmem:[%s5] sm:$0x1]
      %v1172 = vperm.slane %v1170, 0
      %v1174 = vadd.f32 %v1166, %v1172
      %v1175 = vadd.f32 %v1167, %v1172
      %v1176 = vadd.f32 %v1168, %v1172
      %v1177 = vadd.f32 %v1169, %v1172
      %v1178 = vld [vmem:[%s6] sm:$0xff]
      %v1179 = vld [vmem:[%s6 + $0x8] sm:$0xff]
      %v1180 = vld [vmem:[%s6 + $0x10] sm:$0xff]
      %v1181 = vld [vmem:[%s6 + $0x18] sm:$0xff]
      %v1182 = vld [vmem:[%s6 + $0x20] sm:$0xff]
      %v1183 = vld [vmem:[%s6 + $0x28] sm:$0xff]
      %v1184 = vld [vmem:[%s6 + $0x30] sm:$0xff]
      %v1185 = vld [vmem:[%s6 + $0x38] sm:$0xff]
      %v1186 = vld [vmem:[%s6 + $0x40] sm:$0xff]
      %v1187 = vld [vmem:[%s6 + $0x48] sm:$0xff]
      %v1188 = vld [vmem:[%s6 + $0x50] sm:$0xff]
      %v1189 = vld [vmem:[%s6 + $0x58] sm:$0xff]
      %v1190 = vld [vmem:[%s7] sm:$0x1]
      %v1192 = vperm.slane %v1190, 0
      %1194 = vmatpush.msra.mxu0 0.0
      %1195 = vmatpush.msra.mxu0 0.0
      %1196 = vmatpush.msra.mxu0 0.0
      %1197 = vmatpush.msra.mxu0 0.0
      %1198 = vmatpush.msra.mxu0 %v1189
      %1199 = vmatpush.msra.mxu0 %v1188
      %1200 = vmatpush.msra.mxu0 %v1187
      %1201 = vmatpush.msra.mxu0 %v1186
      %1202 = vmatpush.msra.mxu0 %v1185
      %1203 = vmatpush.msra.mxu0 %v1184
      %1204 = vmatpush.msra.mxu0 %v1183
      %1205 = vmatpush.msra.mxu0 %v1182
      %1206 = vmatpush.msra.mxu0 %v1181
      %1207 = vmatpush.msra.mxu0 %v1180
      %1208 = vmatpush.msra.mxu0 %v1179
      %1209 = vmatpush.msra.mxu0 %v1178
      %1210 = vmatmul.f32.gmra.mxu0 %v828
      %v1211 = vpop.f32.mrf.mxu0
      %v1212 = vadd.f32 %v1192, %v1211
      %1213 = vmatmul.f32.gmra.mxu0 %v830
      %v1214 = vpop.f32.mrf.mxu0
      %v1215 = vadd.f32 %v1192, %v1214
      %1216 = vmatmul.f32.gmra.mxu0 %v832
      %v1217 = vpop.f32.mrf.mxu0
      %v1218 = vadd.f32 %v1192, %v1217
      %1219 = vmatmul.f32.gmra.mxu0 %v834
      %v1220 = vpop.f32.mrf.mxu0
      %v1221 = vadd.f32 %v1192, %v1220
      %1222 = vdwg.mxu0
      %v1223 = vadd.f32 %v1174, %v1212
      %v1224 = vadd.f32 %v1175, %v1215
      %v1225 = vadd.f32 %v1176, %v1218
      %v1226 = vadd.f32 %v1177, %v1221
      %v1227 = vld [vmem:[%s8] sm:$0xff]
      %v1228 = vld [vmem:[%s8 + $0x8] sm:$0xff]
      %vm1229 = vcmask 261120
      %v1231 = vsel %vm1229, %v1227, 0
      %v1234 = vsel %vm1229, %v1228, 0
      %1236 = vmatpush.msra.mxu0 0.0
      %1237 = vmatpush.msra.mxu0 0.0
      %1238 = vmatpush.msra.mxu0 0.0
      %1239 = vmatpush.msra.mxu0 0.0
      %1240 = vmatpush.msra.mxu0 0.0
      %1241 = vmatpush.msra.mxu0 0.0
      %1242 = vmatpush.msra.mxu0 0.0
      %1243 = vmatpush.msra.mxu0 0.0
      %1244 = vmatpush.msra.mxu0 0.0
      %1245 = vmatpush.msra.mxu0 0.0
      %1246 = vmatpush.msra.mxu0 0.0
      %1247 = vmatpush.msra.mxu0 0.0
      %1248 = vmatpush.msra.mxu0 %v1226
      %1249 = vmatpush.msra.mxu0 %v1225
      %1250 = vmatpush.msra.mxu0 %v1224
      %1251 = vmatpush.msra.mxu0 %v1223
      %1252 = vmatmul.f32.gmra.mxu0 %v1231
      %v1253 = vpop.f32.mrf.mxu0
      %v1254 = vadd.f32 0.0, %v1253
      %1255 = vmatmul.f32.gmra.mxu0 %v1234
      %v1256 = vpop.f32.mrf.mxu0
      %v1257 = vadd.f32 0.0, %v1256
      %1258 = vdwg.mxu0
      %v1259 = vld [vmem:[%s9] sm:$0xff]
      %v1260 = vld [vmem:[%s9 + $0x8] sm:$0xff]
      %v1261 = vld [vmem:[%s9 + $0x10] sm:$0xff]
      %v1262 = vld [vmem:[%s9 + $0x18] sm:$0xff]
      %v1263 = vld [vmem:[%s9 + $0x20] sm:$0xff]
      %v1264 = vld [vmem:[%s9 + $0x28] sm:$0xff]
      %v1265 = vld [vmem:[%s9 + $0x30] sm:$0xff]
      %v1266 = vld [vmem:[%s9 + $0x38] sm:$0xff]
      %v1267 = vld [vmem:[%s9 + $0x40] sm:$0xff]
      %v1268 = vld [vmem:[%s9 + $0x48] sm:$0xff]
      %v1269 = vld [vmem:[%s9 + $0x50] sm:$0xff]
      %v1270 = vld [vmem:[%s9 + $0x58] sm:$0xff]
      %v1271 = vld [vmem:[%s9 + $0x60] sm:$0xff]
      %v1272 = vld [vmem:[%s9 + $0x68] sm:$0xff]
      %v1273 = vld [vmem:[%s9 + $0x70] sm:$0xff]
      %v1274 = vld [vmem:[%s9 + $0x78] sm:$0xff]
      %1275 = vmatpush.msra.mxu0 %v1274
      %1276 = vmatpush.msra.mxu0 %v1273
      %1277 = vmatpush.msra.mxu0 %v1272
      %1278 = vmatpush.msra.mxu0 %v1271
      %1279 = vmatpush.msra.mxu0 %v1270
      %1280 = vmatpush.msra.mxu0 %v1269
      %1281 = vmatpush.msra.mxu0 %v1268
      %1282 = vmatpush.msra.mxu0 %v1267
      %1283 = vmatpush.msra.mxu0 %v1266
      %1284 = vmatpush.msra.mxu0 %v1265
      %1285 = vmatpush.msra.mxu0 %v1264
      %1286 = vmatpush.msra.mxu0 %v1263
      %1287 = vmatpush.msra.mxu0 %v1262
      %1288 = vmatpush.msra.mxu0 %v1261
      %1289 = vmatpush.msra.mxu0 %v1260
      %1290 = vmatpush.msra.mxu0 %v1259
      %1291 = vmatmul.f32.gmra.mxu0 %v1254
      %v1292 = vpop.f32.mrf.mxu0
      %v1293 = vadd.f32 0.0, %v1292
      %1294 = vmatmul.f32.gmra.mxu0 %v1257
      %v1295 = vpop.f32.mrf.mxu0
      %v1296 = vadd.f32 0.0, %v1295
      %1297 = vdwg.mxu0
      %vm1298 = vcmask 523264
      %1299 = vst.msk [vmem:[%s769] sm:$0xff] %vm1298, %v1293
      %1300 = vst.msk [vmem:[%s769 + $0x8] sm:$0xff] %vm1298, %v1296
      %1301 = vst.msk [vmem:[#allocation4] sm:$0xff] %vm1298, 0.0
      %vm1302 = vcmask 517120
      %1303 = vst.msk [vmem:[#allocation4 + $0x8] sm:$0x3] %vm1302, 0.0
      %1304 = vst.msk [vmem:[#allocation4 + $0x10] sm:$0xff] %vm1298, 0.0
      %1305 = vst.msk [vmem:[#allocation4 + $0x18] sm:$0x3] %vm1302, 0.0
      %1306 = vst.msk [vmem:[#allocation4 + $0x1] sm:$0xff] %vm1298, %v1293
      %1307 = vst.msk [vmem:[#allocation4 + $0x11] sm:$0xff] %vm1298, %v1296
      %v1308 = vld [vmem:[#allocation4] sm:$0xff]
      %v1309 = vld [vmem:[#allocation4 + $0x8] sm:$0x3]
      %v1310 = vld [vmem:[#allocation4 + $0x10] sm:$0xff]
      %v1311 = vld [vmem:[#allocation4 + $0x18] sm:$0x3]
      %v1312 = vmax.f32 %v1308, 0.0
      %v1313 = vmax.f32 %v1309, 0.0
      %v1314 = vmax.f32 %v1310, 0.0
      %v1315 = vmax.f32 %v1311, 0.0
      %v1316 = vld [vmem:[%s10] sm:$0xff]
      %v1317 = vld [vmem:[%s10 + $0x8] sm:$0xff]
      %v1318 = vld [vmem:[%s10 + $0x10] sm:$0xff]
      %v1319 = vld [vmem:[%s10 + $0x18] sm:$0xff]
      %v1320 = vld [vmem:[%s10 + $0x20] sm:$0xff]
      %v1321 = vld [vmem:[%s10 + $0x28] sm:$0xff]
      %v1322 = vld [vmem:[%s10 + $0x30] sm:$0xff]
      %v1323 = vld [vmem:[%s10 + $0x38] sm:$0xff]
      %v1328 = vrot.slane %v1312, 1
      %v1329 = vrot.slane %v1313, 1
      %v1330 = vsel %vm803, %v1328, %v1329
      %v1331 = vrot.slane %v1314, 1
      %v1332 = vrot.slane %v1315, 1
      %v1333 = vsel %vm803, %v1331, %v1332
      %s1334 = scalar_lea.vmem %s10, 64
      %v1335 = vld [vmem:[%s1334] sm:$0xff]
      %v1336 = vld [vmem:[%s1334 + $0x8] sm:$0xff]
      %v1337 = vld [vmem:[%s1334 + $0x10] sm:$0xff]
      %v1338 = vld [vmem:[%s1334 + $0x18] sm:$0xff]
      %v1339 = vld [vmem:[%s1334 + $0x20] sm:$0xff]
      %v1340 = vld [vmem:[%s1334 + $0x28] sm:$0xff]
      %v1341 = vld [vmem:[%s1334 + $0x30] sm:$0xff]
      %v1342 = vld [vmem:[%s1334 + $0x38] sm:$0xff]
      %v1343 = vsel %vm1298, %v1330, 0
      %v1345 = vsel %vm1298, %v1333, 0
      %1347 = vmatpush.msra.mxu0 0.0
      %1348 = vmatpush.msra.mxu0 0.0
      %1349 = vmatpush.msra.mxu0 0.0
      %1350 = vmatpush.msra.mxu0 0.0
      %1351 = vmatpush.msra.mxu0 0.0
      %1352 = vmatpush.msra.mxu0 0.0
      %1353 = vmatpush.msra.mxu0 0.0
      %1354 = vmatpush.msra.mxu0 0.0
      %1355 = vmatpush.msra.mxu0 %v1342
      %1356 = vmatpush.msra.mxu0 %v1341
      %1357 = vmatpush.msra.mxu0 %v1340
      %1358 = vmatpush.msra.mxu0 %v1339
      %1359 = vmatpush.msra.mxu0 %v1338
      %1360 = vmatpush.msra.mxu0 %v1337
      %1361 = vmatpush.msra.mxu0 %v1336
      %1362 = vmatpush.msra.mxu0 %v1335
      %1363 = vmatmul.f32.gmra.mxu0 %v1343
      %v1364 = vpop.f32.mrf.mxu0
      %v1365 = vadd.f32 0.0, %v1364
      %1366 = vmatmul.f32.gmra.mxu0 %v1345
      %v1367 = vpop.f32.mrf.mxu0
      %v1368 = vadd.f32 0.0, %v1367
      %1369 = vdwg.mxu0
      %v1370 = vsel %vm1298, %v1312, 0
      %v1372 = vsel %vm1298, %v1314, 0
      %1374 = vmatpush.msra.mxu0 0.0
      %1375 = vmatpush.msra.mxu0 0.0
      %1376 = vmatpush.msra.mxu0 0.0
      %1377 = vmatpush.msra.mxu0 0.0
      %1378 = vmatpush.msra.mxu0 0.0
      %1379 = vmatpush.msra.mxu0 0.0
      %1380 = vmatpush.msra.mxu0 0.0
      %1381 = vmatpush.msra.mxu0 0.0
      %1382 = vmatpush.msra.mxu0 %v1323
      %1383 = vmatpush.msra.mxu0 %v1322
      %1384 = vmatpush.msra.mxu0 %v1321
      %1385 = vmatpush.msra.mxu0 %v1320
      %1386 = vmatpush.msra.mxu0 %v1319
      %1387 = vmatpush.msra.mxu0 %v1318
      %1388 = vmatpush.msra.mxu0 %v1317
      %1389 = vmatpush.msra.mxu0 %v1316
      %1390 = vmatmul.f32.gmra.mxu0 %v1370
      %v1391 = vpop.f32.mrf.mxu0
      %v1392 = vadd.f32 %v1365, %v1391
      %1393 = vmatmul.f32.gmra.mxu0 %v1372
      %v1394 = vpop.f32.mrf.mxu0
      %v1395 = vadd.f32 %v1368, %v1394
      %1396 = vdwg.mxu0
      %v1397 = vrot.slane %v1312, 2
      %v1398 = vrot.slane %v1313, 2
      %v1399 = vsel %vm902, %v1397, %v1398
      %v1400 = vrot.slane %v1314, 2
      %v1401 = vrot.slane %v1315, 2
      %v1402 = vsel %vm902, %v1400, %v1401
      %s1403 = scalar_lea.vmem %s10, 128
      %v1404 = vld [vmem:[%s1403] sm:$0xff]
      %v1405 = vld [vmem:[%s1403 + $0x8] sm:$0xff]
      %v1406 = vld [vmem:[%s1403 + $0x10] sm:$0xff]
      %v1407 = vld [vmem:[%s1403 + $0x18] sm:$0xff]
      %v1408 = vld [vmem:[%s1403 + $0x20] sm:$0xff]
      %v1409 = vld [vmem:[%s1403 + $0x28] sm:$0xff]
      %v1410 = vld [vmem:[%s1403 + $0x30] sm:$0xff]
      %v1411 = vld [vmem:[%s1403 + $0x38] sm:$0xff]
      %v1412 = vsel %vm1298, %v1399, 0
      %v1414 = vsel %vm1298, %v1402, 0
      %1416 = vmatpush.msra.mxu0 0.0
      %1417 = vmatpush.msra.mxu0 0.0
      %1418 = vmatpush.msra.mxu0 0.0
      %1419 = vmatpush.msra.mxu0 0.0
      %1420 = vmatpush.msra.mxu0 0.0
      %1421 = vmatpush.msra.mxu0 0.0
      %1422 = vmatpush.msra.mxu0 0.0
      %1423 = vmatpush.msra.mxu0 0.0
      %1424 = vmatpush.msra.mxu0 %v1411
      %1425 = vmatpush.msra.mxu0 %v1410
      %1426 = vmatpush.msra.mxu0 %v1409
      %1427 = vmatpush.msra.mxu0 %v1408
      %1428 = vmatpush.msra.mxu0 %v1407
      %1429 = vmatpush.msra.mxu0 %v1406
      %1430 = vmatpush.msra.mxu0 %v1405
      %1431 = vmatpush.msra.mxu0 %v1404
      %1432 = vmatmul.f32.gmra.mxu0 %v1412
      %v1433 = vpop.f32.mrf.mxu0
      %v1434 = vadd.f32 0.0, %v1433
      %1435 = vmatmul.f32.gmra.mxu0 %v1414
      %v1436 = vpop.f32.mrf.mxu0
      %v1437 = vadd.f32 0.0, %v1436
      %1438 = vdwg.mxu0
      %v1439 = vadd.f32 %v1392, %v1434
      %v1440 = vadd.f32 %v1395, %v1437
      %v1441 = vld [vmem:[%s11] sm:$0x1]
      %v1443 = vperm.slane %v1441, 0
      %v1445 = vadd.f32 %v1439, %v1443
      %v1446 = vadd.f32 %v1440, %v1443
      %v1447 = vmax.f32 %v1445, 0.0
      %v1448 = vmax.f32 %v1446, 0.0
      %1449 = vst [vmem:[#allocation3] sm:$0xff] 0.0
      %1450 = vst [vmem:[#allocation3 + $0x8] sm:$0x3] 0.0
      %1451 = vst [vmem:[#allocation3 + $0x10] sm:$0xff] 0.0
      %1452 = vst [vmem:[#allocation3 + $0x18] sm:$0x3] 0.0
      %1453 = vst [vmem:[#allocation3 + $0x1] sm:$0xff] %v1447
      %1454 = vst [vmem:[#allocation3 + $0x11] sm:$0xff] %v1448
      %v1455 = vld [vmem:[#allocation3] sm:$0xff]
      %v1456 = vld [vmem:[#allocation3 + $0x8] sm:$0x3]
      %v1457 = vld [vmem:[#allocation3 + $0x10] sm:$0xff]
      %v1458 = vld [vmem:[#allocation3 + $0x18] sm:$0x3]
      %v1459 = vld [vmem:[%s12] sm:$0xff]
      %v1460 = vld [vmem:[%s12 + $0x8] sm:$0xff]
      %v1461 = vld [vmem:[%s12 + $0x10] sm:$0xff]
      %v1462 = vld [vmem:[%s12 + $0x18] sm:$0xff]
      %v1463 = vld [vmem:[%s12 + $0x20] sm:$0xff]
      %v1464 = vld [vmem:[%s12 + $0x28] sm:$0xff]
      %v1465 = vld [vmem:[%s12 + $0x30] sm:$0xff]
      %v1466 = vld [vmem:[%s12 + $0x38] sm:$0xff]
      %v1467 = vld [vmem:[%s12 + $0x40] sm:$0xff]
      %v1468 = vld [vmem:[%s12 + $0x48] sm:$0xff]
      %v1469 = vld [vmem:[%s12 + $0x50] sm:$0xff]
      %v1470 = vld [vmem:[%s12 + $0x58] sm:$0xff]
      %v1471 = vld [vmem:[%s12 + $0x60] sm:$0xff]
      %v1472 = vld [vmem:[%s12 + $0x68] sm:$0xff]
      %v1473 = vld [vmem:[%s12 + $0x70] sm:$0xff]
      %v1474 = vld [vmem:[%s12 + $0x78] sm:$0xff]
      %v1479 = vrot.slane %v1455, 1
      %v1480 = vrot.slane %v1456, 1
      %v1481 = vsel %vm803, %v1479, %v1480
      %v1482 = vrot.slane %v1457, 1
      %v1483 = vrot.slane %v1458, 1
      %v1484 = vsel %vm803, %v1482, %v1483
      %s1487 = scalar_lea.vmem %s12, 128
      %v1488 = vld [vmem:[%s1487] sm:$0xff]
      %v1489 = vld [vmem:[%s1487 + $0x8] sm:$0xff]
      %v1490 = vld [vmem:[%s1487 + $0x10] sm:$0xff]
      %v1491 = vld [vmem:[%s1487 + $0x18] sm:$0xff]
      %v1492 = vld [vmem:[%s1487 + $0x20] sm:$0xff]
      %v1493 = vld [vmem:[%s1487 + $0x28] sm:$0xff]
      %v1494 = vld [vmem:[%s1487 + $0x30] sm:$0xff]
      %v1495 = vld [vmem:[%s1487 + $0x38] sm:$0xff]
      %v1496 = vld [vmem:[%s1487 + $0x40] sm:$0xff]
      %v1497 = vld [vmem:[%s1487 + $0x48] sm:$0xff]
      %v1498 = vld [vmem:[%s1487 + $0x50] sm:$0xff]
      %v1499 = vld [vmem:[%s1487 + $0x58] sm:$0xff]
      %v1500 = vld [vmem:[%s1487 + $0x60] sm:$0xff]
      %v1501 = vld [vmem:[%s1487 + $0x68] sm:$0xff]
      %v1502 = vld [vmem:[%s1487 + $0x70] sm:$0xff]
      %v1503 = vld [vmem:[%s1487 + $0x78] sm:$0xff]
      %1504 = vmatpush.msra.mxu0 %v1503
      %1505 = vmatpush.msra.mxu0 %v1502
      %1506 = vmatpush.msra.mxu0 %v1501
      %1507 = vmatpush.msra.mxu0 %v1500
      %1508 = vmatpush.msra.mxu0 %v1499
      %1509 = vmatpush.msra.mxu0 %v1498
      %1510 = vmatpush.msra.mxu0 %v1497
      %1511 = vmatpush.msra.mxu0 %v1496
      %1512 = vmatpush.msra.mxu0 %v1495
      %1513 = vmatpush.msra.mxu0 %v1494
      %1514 = vmatpush.msra.mxu0 %v1493
      %1515 = vmatpush.msra.mxu0 %v1492
      %1516 = vmatpush.msra.mxu0 %v1491
      %1517 = vmatpush.msra.mxu0 %v1490
      %1518 = vmatpush.msra.mxu0 %v1489
      %1519 = vmatpush.msra.mxu0 %v1488
      %1520 = vmatmul.f32.gmra.mxu0 %v1481
      %v1521 = vpop.f32.mrf.mxu0
      %v1522 = vadd.f32 0.0, %v1521
      %1523 = vmatmul.f32.gmra.mxu0 %v1484
      %v1524 = vpop.f32.mrf.mxu0
      %v1525 = vadd.f32 0.0, %v1524
      %1526 = vdwg.mxu0
      %1527 = vmatpush.msra.mxu0 %v1474
      %1528 = vmatpush.msra.mxu0 %v1473
      %1529 = vmatpush.msra.mxu0 %v1472
      %1530 = vmatpush.msra.mxu0 %v1471
      %1531 = vmatpush.msra.mxu0 %v1470
      %1532 = vmatpush.msra.mxu0 %v1469
      %1533 = vmatpush.msra.mxu0 %v1468
      %1534 = vmatpush.msra.mxu0 %v1467
      %1535 = vmatpush.msra.mxu0 %v1466
      %1536 = vmatpush.msra.mxu0 %v1465
      %1537 = vmatpush.msra.mxu0 %v1464
      %1538 = vmatpush.msra.mxu0 %v1463
      %1539 = vmatpush.msra.mxu0 %v1462
      %1540 = vmatpush.msra.mxu0 %v1461
      %1541 = vmatpush.msra.mxu0 %v1460
      %1542 = vmatpush.msra.mxu0 %v1459
      %1543 = vmatmul.f32.gmra.mxu0 %v1455
      %v1544 = vpop.f32.mrf.mxu0
      %v1545 = vadd.f32 %v1522, %v1544
      %1546 = vmatmul.f32.gmra.mxu0 %v1457
      %v1547 = vpop.f32.mrf.mxu0
      %v1548 = vadd.f32 %v1525, %v1547
      %1549 = vdwg.mxu0
      %v1550 = vrot.slane %v1455, 2
      %v1551 = vrot.slane %v1456, 2
      %v1552 = vsel %vm902, %v1550, %v1551
      %v1553 = vrot.slane %v1457, 2
      %v1554 = vrot.slane %v1458, 2
      %v1555 = vsel %vm902, %v1553, %v1554
      %s1558 = scalar_lea.vmem %s12, 256
      %v1559 = vld [vmem:[%s1558] sm:$0xff]
      %v1560 = vld [vmem:[%s1558 + $0x8] sm:$0xff]
      %v1561 = vld [vmem:[%s1558 + $0x10] sm:$0xff]
      %v1562 = vld [vmem:[%s1558 + $0x18] sm:$0xff]
      %v1563 = vld [vmem:[%s1558 + $0x20] sm:$0xff]
      %v1564 = vld [vmem:[%s1558 + $0x28] sm:$0xff]
      %v1565 = vld [vmem:[%s1558 + $0x30] sm:$0xff]
      %v1566 = vld [vmem:[%s1558 + $0x38] sm:$0xff]
      %v1567 = vld [vmem:[%s1558 + $0x40] sm:$0xff]
      %v1568 = vld [vmem:[%s1558 + $0x48] sm:$0xff]
      %v1569 = vld [vmem:[%s1558 + $0x50] sm:$0xff]
      %v1570 = vld [vmem:[%s1558 + $0x58] sm:$0xff]
      %v1571 = vld [vmem:[%s1558 + $0x60] sm:$0xff]
      %v1572 = vld [vmem:[%s1558 + $0x68] sm:$0xff]
      %v1573 = vld [vmem:[%s1558 + $0x70] sm:$0xff]
      %v1574 = vld [vmem:[%s1558 + $0x78] sm:$0xff]
      %1575 = vmatpush.msra.mxu0 %v1574
      %1576 = vmatpush.msra.mxu0 %v1573
      %1577 = vmatpush.msra.mxu0 %v1572
      %1578 = vmatpush.msra.mxu0 %v1571
      %1579 = vmatpush.msra.mxu0 %v1570
      %1580 = vmatpush.msra.mxu0 %v1569
      %1581 = vmatpush.msra.mxu0 %v1568
      %1582 = vmatpush.msra.mxu0 %v1567
      %1583 = vmatpush.msra.mxu0 %v1566
      %1584 = vmatpush.msra.mxu0 %v1565
      %1585 = vmatpush.msra.mxu0 %v1564
      %1586 = vmatpush.msra.mxu0 %v1563
      %1587 = vmatpush.msra.mxu0 %v1562
      %1588 = vmatpush.msra.mxu0 %v1561
      %1589 = vmatpush.msra.mxu0 %v1560
      %1590 = vmatpush.msra.mxu0 %v1559
      %1591 = vmatmul.f32.gmra.mxu0 %v1552
      %v1592 = vpop.f32.mrf.mxu0
      %v1593 = vadd.f32 0.0, %v1592
      %1594 = vmatmul.f32.gmra.mxu0 %v1555
      %v1595 = vpop.f32.mrf.mxu0
      %v1596 = vadd.f32 0.0, %v1595
      %1597 = vdwg.mxu0
      %v1598 = vadd.f32 %v1545, %v1593
      %v1599 = vadd.f32 %v1548, %v1596
      %v1600 = vld [vmem:[%s13] sm:$0x1]
      %v1602 = vperm.slane %v1600, 0
      %v1604 = vadd.f32 %v1598, %v1602
      %v1605 = vadd.f32 %v1599, %v1602
      %v1610 = vrot.slane %v1308, 1
      %v1611 = vrot.slane %v1309, 1
      %v1612 = vsel %vm803, %v1610, %v1611
      %v1613 = vrot.slane %v1310, 1
      %v1614 = vrot.slane %v1311, 1
      %v1615 = vsel %vm803, %v1613, %v1614
      %v1616 = vld [vmem:[%s14] sm:$0xff]
      %v1617 = vld [vmem:[%s14 + $0x8] sm:$0xff]
      %v1618 = vld [vmem:[%s14 + $0x10] sm:$0xff]
      %v1619 = vld [vmem:[%s14 + $0x18] sm:$0xff]
      %v1620 = vld [vmem:[%s14 + $0x20] sm:$0xff]
      %v1621 = vld [vmem:[%s14 + $0x28] sm:$0xff]
      %v1622 = vld [vmem:[%s14 + $0x30] sm:$0xff]
      %v1623 = vld [vmem:[%s14 + $0x38] sm:$0xff]
      %v1624 = vld [vmem:[%s15] sm:$0x1]
      %v1626 = vperm.slane %v1624, 0
      %v1628 = vsel %vm1298, %v1612, 0
      %v1630 = vsel %vm1298, %v1615, 0
      %1632 = vmatpush.msra.mxu0 0.0
      %1633 = vmatpush.msra.mxu0 0.0
      %1634 = vmatpush.msra.mxu0 0.0
      %1635 = vmatpush.msra.mxu0 0.0
      %1636 = vmatpush.msra.mxu0 0.0
      %1637 = vmatpush.msra.mxu0 0.0
      %1638 = vmatpush.msra.mxu0 0.0
      %1639 = vmatpush.msra.mxu0 0.0
      %1640 = vmatpush.msra.mxu0 %v1623
      %1641 = vmatpush.msra.mxu0 %v1622
      %1642 = vmatpush.msra.mxu0 %v1621
      %1643 = vmatpush.msra.mxu0 %v1620
      %1644 = vmatpush.msra.mxu0 %v1619
      %1645 = vmatpush.msra.mxu0 %v1618
      %1646 = vmatpush.msra.mxu0 %v1617
      %1647 = vmatpush.msra.mxu0 %v1616
      %1648 = vmatmul.f32.gmra.mxu0 %v1628
      %v1649 = vpop.f32.mrf.mxu0
      %v1650 = vadd.f32 %v1626, %v1649
      %1651 = vmatmul.f32.gmra.mxu0 %v1630
      %v1652 = vpop.f32.mrf.mxu0
      %v1653 = vadd.f32 %v1626, %v1652
      %1654 = vdwg.mxu0
      %v1655 = vadd.f32 %v1604, %v1650
      %v1656 = vadd.f32 %v1605, %v1653
      %v1657 = vld [vmem:[%s16] sm:$0xff]
      %vm1658 = vcmask 130048
      %v1660 = vsel %vm1658, %v1657, 0
      %1662 = vmatpush.msra.mxu0 0.0
      %1663 = vmatpush.msra.mxu0 0.0
      %1664 = vmatpush.msra.mxu0 0.0
      %1665 = vmatpush.msra.mxu0 0.0
      %1666 = vmatpush.msra.mxu0 0.0
      %1667 = vmatpush.msra.mxu0 0.0
      %1668 = vmatpush.msra.mxu0 0.0
      %1669 = vmatpush.msra.mxu0 0.0
      %1670 = vmatpush.msra.mxu0 0.0
      %1671 = vmatpush.msra.mxu0 0.0
      %1672 = vmatpush.msra.mxu0 0.0
      %1673 = vmatpush.msra.mxu0 0.0
      %1674 = vmatpush.msra.mxu0 0.0
      %1675 = vmatpush.msra.mxu0 0.0
      %1676 = vmatpush.msra.mxu0 %v1656
      %1677 = vmatpush.msra.mxu0 %v1655
      %1678 = vmatmul.f32.gmra.mxu0 %v1660
      %v1679 = vpop.f32.mrf.mxu0
      %v1680 = vadd.f32 0.0, %v1679
      %1681 = vdwg.mxu0
      %v1682 = vld [vmem:[%s17] sm:$0xff]
      %v1683 = vld [vmem:[%s17 + $0x8] sm:$0xff]
      %v1684 = vld [vmem:[%s17 + $0x10] sm:$0xff]
      %v1685 = vld [vmem:[%s17 + $0x18] sm:$0xff]
      %v1686 = vld [vmem:[%s17 + $0x20] sm:$0xff]
      %v1687 = vld [vmem:[%s17 + $0x28] sm:$0xff]
      %v1688 = vld [vmem:[%s17 + $0x30] sm:$0xff]
      %v1689 = vld [vmem:[%s17 + $0x38] sm:$0xff]
      %v1690 = vld [vmem:[%s17 + $0x40] sm:$0xff]
      %v1691 = vld [vmem:[%s17 + $0x48] sm:$0xff]
      %v1692 = vld [vmem:[%s17 + $0x50] sm:$0xff]
      %v1693 = vld [vmem:[%s17 + $0x58] sm:$0xff]
      %v1694 = vld [vmem:[%s17 + $0x60] sm:$0xff]
      %v1695 = vld [vmem:[%s17 + $0x68] sm:$0xff]
      %v1696 = vld [vmem:[%s17 + $0x70] sm:$0xff]
      %v1697 = vld [vmem:[%s17 + $0x78] sm:$0xff]
      %1698 = vmatpush.msra.mxu0 %v1697
      %1699 = vmatpush.msra.mxu0 %v1696
      %1700 = vmatpush.msra.mxu0 %v1695
      %1701 = vmatpush.msra.mxu0 %v1694
      %1702 = vmatpush.msra.mxu0 %v1693
      %1703 = vmatpush.msra.mxu0 %v1692
      %1704 = vmatpush.msra.mxu0 %v1691
      %1705 = vmatpush.msra.mxu0 %v1690
      %1706 = vmatpush.msra.mxu0 %v1689
      %1707 = vmatpush.msra.mxu0 %v1688
      %1708 = vmatpush.msra.mxu0 %v1687
      %1709 = vmatpush.msra.mxu0 %v1686
      %1710 = vmatpush.msra.mxu0 %v1685
      %1711 = vmatpush.msra.mxu0 %v1684
      %1712 = vmatpush.msra.mxu0 %v1683
      %1713 = vmatpush.msra.mxu0 %v1682
      %1714 = vmatmul.f32.gmra.mxu0 %v1680
      %v1715 = vpop.f32.mrf.mxu0
      %v1716 = vadd.f32 0.0, %v1715
      %1717 = vdwg.mxu0
      %1718 = vst.msk [vmem:[%s773] sm:$0xff] %vm1298, %v1716
      %v1719 = vmax.f32 %v1716, 0.0
      %v1720 = vld [vmem:[%s20] sm:$0x3]
      %vm1721 = vcmask 64512
      %v1723 = vsel %vm1721, %v1720, 0
      %1725 = vmatpush.msra.mxu0 0.0
      %1726 = vmatpush.msra.mxu0 0.0
      %1727 = vmatpush.msra.mxu0 0.0
      %1728 = vmatpush.msra.mxu0 0.0
      %1729 = vmatpush.msra.mxu0 0.0
      %1730 = vmatpush.msra.mxu0 0.0
      %1731 = vmatpush.msra.mxu0 0.0
      %1732 = vmatpush.msra.mxu0 0.0
      %1733 = vmatpush.msra.mxu0 0.0
      %1734 = vmatpush.msra.mxu0 0.0
      %1735 = vmatpush.msra.mxu0 0.0
      %1736 = vmatpush.msra.mxu0 0.0
      %1737 = vmatpush.msra.mxu0 0.0
      %1738 = vmatpush.msra.mxu0 0.0
      %1739 = vmatpush.msra.mxu0 0.0
      %1740 = vmatpush.msra.mxu0 %v1719
      %1741 = vmatmul.f32.gmra.mxu0 %v1723
      %v1742 = vpop.f32.mrf.mxu0
      %v1743 = vadd.f32 0.0, %v1742
      %1744 = vdwg.mxu0
      %v1745 = vld [vmem:[%s21] sm:$0xff]
      %v1746 = vld [vmem:[%s21 + $0x8] sm:$0xff]
      %v1747 = vld [vmem:[%s21 + $0x10] sm:$0xff]
      %v1748 = vld [vmem:[%s21 + $0x18] sm:$0xff]
      %v1749 = vld [vmem:[%s21 + $0x20] sm:$0xff]
      %v1750 = vld [vmem:[%s21 + $0x28] sm:$0xff]
      %v1751 = vld [vmem:[%s21 + $0x30] sm:$0xff]
      %v1752 = vld [vmem:[%s21 + $0x38] sm:$0xff]
      %v1754 = vsel %vm1298, %v1743, 0
      %1756 = vmatpush.msra.mxu0 0.0
      %1757 = vmatpush.msra.mxu0 0.0
      %1758 = vmatpush.msra.mxu0 0.0
      %1759 = vmatpush.msra.mxu0 0.0
      %1760 = vmatpush.msra.mxu0 0.0
      %1761 = vmatpush.msra.mxu0 0.0
      %1762 = vmatpush.msra.mxu0 0.0
      %1763 = vmatpush.msra.mxu0 0.0
      %1764 = vmatpush.msra.mxu0 %v1752
      %1765 = vmatpush.msra.mxu0 %v1751
      %1766 = vmatpush.msra.mxu0 %v1750
      %1767 = vmatpush.msra.mxu0 %v1749
      %1768 = vmatpush.msra.mxu0 %v1748
      %1769 = vmatpush.msra.mxu0 %v1747
      %1770 = vmatpush.msra.mxu0 %v1746
      %1771 = vmatpush.msra.mxu0 %v1745
      %1772 = vmatmul.f32.gmra.mxu0 %v1754
      %v1773 = vpop.f32.mrf.mxu0
      %v1774 = vadd.f32 0.0, %v1773
      %1775 = vdwg.mxu0
      %v1776 = vld [vmem:[%s18] sm:$0xff]
      %v1777 = vld [vmem:[%s18 + $0x8] sm:$0xff]
      %v1778 = vld [vmem:[#allocation5] sm:$0x1]
      %v1780 = vperm.slane %v1778, 0
      %v1783 = vsel %vm1658, %v1774, 0
      %1785 = vmatpush.msra.mxu0 0.0
      %1786 = vmatpush.msra.mxu0 0.0
      %1787 = vmatpush.msra.mxu0 0.0
      %1788 = vmatpush.msra.mxu0 0.0
      %1789 = vmatpush.msra.mxu0 0.0
      %1790 = vmatpush.msra.mxu0 0.0
      %1791 = vmatpush.msra.mxu0 0.0
      %1792 = vmatpush.msra.mxu0 0.0
      %1793 = vmatpush.msra.mxu0 0.0
      %1794 = vmatpush.msra.mxu0 0.0
      %1795 = vmatpush.msra.mxu0 0.0
      %1796 = vmatpush.msra.mxu0 0.0
      %1797 = vmatpush.msra.mxu0 0.0
      %1798 = vmatpush.msra.mxu0 0.0
      %1799 = vmatpush.msra.mxu0 %v1777
      %1800 = vmatpush.msra.mxu0 %v1776
      %1801 = vmatmul.f32.gmra.mxu0 %v1783
      %v1802 = vpop.f32.mrf.mxu0
      %v1803 = vadd.f32 %v1780, %v1802
      %1804 = vdwg.mxu0
      %v1805 = vmul.f32 %v1774, %v784
      %vm1806 = vcmask 123904
      %v1807 = vsel %vm1806, %v1805, 0.0
      %1808 = vadd.xlane.f32.xlu0 %v1807
      %v1809 = vpop.xlane.xlu0 %1808
      %v1810 = vadd.f32 %v1809, %v1803
      %vm1811 = vcmask 1024
      %1812 = vst.msk [vmem:[%s777] sm:$0x3] %vm1811, %v1810
      %p1813 = scmp.lt.s32.totalorder %s38, 1
      %s1814 = scalar_select %p1813, %s38, 1
      %s1815 = smul.addr %s1814, 2
      %s1816 = smul.addr %s1815, 8
      %s1817 = scalar_lea.vmem %s22, %s1816
      %p1818 = scmp.lt.s32.totalorder %s38, 1
      %s1819 = scalar_select %p1818, %s38, 1
      %s1820 = smul.addr %s1819, 8
      %s1821 = scalar_lea.vmem %s23, %s1820
      %p1822 = scmp.lt.s32.totalorder %s38, 1
      %s1823 = scalar_select %p1822, %s38, 1
      %s1824 = smul.addr %s1823, 2
      %s1825 = scalar_lea.vmem %s24, %s1824
      // Predicated region
      $region109: #{fwd.1} parent=107 // pred_check
        %p1826 = pneg %p528
      $region110: #{fwd.1} parent=107 // pred_check_branch
        %1828 = sbr.rel (%p1826) target = $region112
      $region111: #{fwd.1} parent=107 // pred_region
        _
      $region112: #{fwd.1} parent=107 // pred_fallthru
        _
      // Predicated region
      $region113: #{fwd.1} parent=107 // pred_check
        %p1829 = pneg %p554
      $region114: #{fwd.1} parent=107 // pred_check_branch
        %1831 = sbr.rel (%p1829) target = $region116
      $region115: #{fwd.1} parent=107 // pred_region
        _
      $region116: #{fwd.1} parent=107 // pred_fallthru
        _
      // Predicated region
      $region117: #{fwd.1} parent=107 // pred_check
        %p1832 = pneg %p580
      $region118: #{fwd.1} parent=107 // pred_check_branch
        %1834 = sbr.rel (%p1832) target = $region120
      $region119: #{fwd.1} parent=107 // pred_region
        _
      $region120: #{fwd.1} parent=107 // pred_fallthru
        _
    $region108: #{fwd.1} parent=5 // pred_fallthru
      _
    %p1835 = scmp.le.s32.totalorder 2, %s33
    // Predicated region
    $region121: #{fwd.1} parent=5 // pred_check
      %p1836 = pneg %p1835
    $region122: #{fwd.1} parent=5 // pred_check_branch
      %1838 = sbr.rel (%p1836) target = $region124
    $region123: #{fwd.1} parent=5 // pred_region
      %s1839 = ssub.s32 %s33, 2
      // Predicated region
      $region125: #{fwd.1} parent=123 // pred_check
        %p1840 = pneg %p534
      $region126: #{fwd.1} parent=123 // pred_check_branch
        %1842 = sbr.rel (%p1840) target = $region128
      $region127: #{fwd.1} parent=123 // pred_region
        %p1843 = scmp.lt.s32.totalorder %s39, 1
        %s1844 = scalar_select %p1843, %s39, 1
        %s1845 = smul.addr %s1844, 2
        %s1846 = smul.addr %s1845, 8
        %s1847 = scalar_lea.vmem %s22, %s1846
      $region128: #{fwd.1} parent=123 // pred_fallthru
        _
      // Predicated region
      $region129: #{fwd.1} parent=123 // pred_check
        %p1848 = pneg %p560
      $region130: #{fwd.1} parent=123 // pred_check_branch
        %1850 = sbr.rel (%p1848) target = $region132
      $region131: #{fwd.1} parent=123 // pred_region
        %p1851 = scmp.lt.s32.totalorder %s39, 1
        %s1852 = scalar_select %p1851, %s39, 1
        %s1853 = smul.addr %s1852, 8
        %s1854 = scalar_lea.vmem %s23, %s1853
      $region132: #{fwd.1} parent=123 // pred_fallthru
        _
      // Predicated region
      $region133: #{fwd.1} parent=123 // pred_check
        %p1855 = pneg %p586
      $region134: #{fwd.1} parent=123 // pred_check_branch
        %1857 = sbr.rel (%p1855) target = $region136
      $region135: #{fwd.1} parent=123 // pred_region
        %p1858 = scmp.lt.s32.totalorder %s39, 1
        %s1859 = scalar_select %p1858, %s39, 1
        %s1860 = smul.addr %s1859, 2
        %s1861 = scalar_lea.vmem %s24, %s1860
      $region136: #{fwd.1} parent=123 // pred_fallthru
        _
    $region124: #{fwd.1} parent=5 // pred_fallthru
      _
  $region6: #{fwd.1} parent=0 // loop_footer
    %s37 = sadd.s32 1, %s33
  $region7: #{fwd.1} parent=0 // loop_footer_branch
    %32 = sbr.rel target = $region3
  $region8: #{fwd.1} parent=0 // loop_exit
    _

</llo_original>
